<compile_context>
chip_gen: v7x
topology: tpu7x:2x2x1
jax: 0.10.0
libtpu: 0.0.40
codegen_flags: <defaults>
</compile_context>

<pallas_src>
import functools
import math

import jax
import jax.numpy as jnp
from jax.experimental import pallas as pl
from jax.experimental.pallas import tpu as pltpu


_MASK = -1.0e30  # large-negative finite: exp(_MASK - m) underflows to exactly 0.0


def _layernorm(x, gamma, beta, eps=1e-5):
    x = x.astype(jnp.float32)
    mean = jnp.mean(x, axis=-1, keepdims=True)
    var = jnp.mean(jnp.square(x - mean), axis=-1, keepdims=True)
    return (x - mean) * jax.lax.rsqrt(var + eps) * gamma + beta


def _erf(x):
    # Abramowitz & Stegun 7.1.26 (max abs error 1.5e-7) -- exp/VPU only, so the
    # kernel does not depend on a lax.erf lowering rule.
    a1, a2, a3, a4, a5 = (0.254829592, -0.284496736, 1.421413741,
                          -1.453152027, 1.061405429)
    p = 0.3275911
    sign = jnp.where(x >= 0.0, 1.0, -1.0)
    ax = jnp.abs(x)
    t = 1.0 / (1.0 + p * ax)
    poly = ((((a5 * t + a4) * t + a3) * t + a2) * t + a1) * t
    return sign * (1.0 - poly * jnp.exp(-ax * ax))


def _gelu_exact(x):
    # nn.GELU() default (exact erf GELU)
    return 0.5 * x * (1.0 + _erf(x * 0.7071067811865476))


def transformer_causal_kernel(
    # --- inputs ---
    x_ref,
    wq_ref, wk_ref, wv_ref, bq_ref, bk_ref, bv_ref,
    wo_ref, bo_ref,
    g_attn_ref, b_attn_ref, g_ff_ref, b_ff_ref,
    w1_ref, b1_ref, w2_ref, b2_ref,
    # --- outputs then scratch ---
    *refs,
    n_heads, tq, with_weights):
    y_ref = refs[0]
    if with_weights:
        attnw_ref = refs[1]
        xn_s, q_s, kT_s, v_s, s_s, ctx_s, ctxacc_s = refs[2:]
    else:
        attnw_ref = None
        xn_s, q_s, kT_s, v_s, s_s, ctx_s, ctxacc_s = refs[1:]

    L, D = xn_s.shape
    H = n_heads
    dh = D // H
    nkv = L // tq                       # key tiles == query tiles
    scale = 1.0 / math.sqrt(dh)
    qi = pl.program_id(1)

    # ---- fill phase: once per batch row (qi == 0) --------------------------
    # attn-LN + Q / K^T / V projections for the full sequence, cached in VMEM
    # scratch and reused by every query block of this batch row.  The three
    # projections are kept as separate (L,D)@(D,D) matmuls so the transient f32
    # result is bounded by L*D*4 bytes (same MXU depth as a fused QKV matmul).
    @pl.when(qi == 0)
    def _fill():
        x = x_ref[0].astype(jnp.float32)                            # (L, D)
        xn = _layernorm(x, g_attn_ref[0], b_attn_ref[0])
        xn_s[...] = xn
        xn_bf = xn.astype(jnp.bfloat16)
        q = jnp.dot(xn_bf, wq_ref[...],
                    preferred_element_type=jnp.float32) + bq_ref[0]
        q_s[...] = (q * scale).astype(jnp.bfloat16)                 # fold 1/sqrt(dh)
        k = jnp.dot(xn_bf, wk_ref[...],
                    preferred_element_type=jnp.float32) + bk_ref[0]
        kT_s[...] = k.T.astype(jnp.bfloat16)                        # (D, L), once
        v = jnp.dot(xn_bf, wv_ref[...],
                    preferred_element_type=jnp.float32) + bv_ref[0]
        v_s[...] = v.astype(jnp.bfloat16)

    # ---- per-query-block attention ------------------------------------------
    q_start = pl.multiple_of(qi * tq, tq)
    xn_q = xn_s[pl.ds(q_start, tq), :]            # (tq, D) f32, for the residual
    q_blk = q_s[pl.ds(q_start, tq), :]            # (tq, D) bf16, pre-scaled

    # masked region of the score row stays at _MASK for every head
    s_s[...] = jnp.full((tq, L), _MASK, jnp.float32)

    w_sum = jnp.zeros((tq, L), jnp.float32) if with_weights else None

    for h in range(H):                            # static unroll, H is small
        c_lo = h * dh
        c_hi = c_lo + dh
        q_h = q_blk[:, c_lo:c_hi]                 # (tq, dh) bf16

        # scores: only causally-reachable key tiles (kj <= qi)
        for kj in range(nkv):
            k0 = kj * tq

            @pl.when(kj <= qi)
            def _score(k0=k0, q_h=q_h, c_lo=c_lo, c_hi=c_hi):
                kt = kT_s[c_lo:c_hi, k0:k0 + tq]                     # (dh, tk) bf16
                st = jnp.dot(q_h, kt, preferred_element_type=jnp.float32)
                rg = q_start + jax.lax.broadcasted_iota(jnp.int32, (tq, tq), 0)
                cg = k0 + jax.lax.broadcasted_iota(jnp.int32, (tq, tq), 1)
                s_s[:, k0:k0 + tq] = jnp.where(cg <= rg, st, _MASK)

        s = s_s[...]                                                 # (tq, L) f32
        m = jnp.max(s, axis=-1, keepdims=True)
        p = jnp.exp(s - m)
        # EUP reciprocal instead of a VPU divide sequence (probability rows sum
        # to 1 only to ~1e-3 relative; documented, within the test tolerance)
        p = p * pl.reciprocal(jnp.sum(p, axis=-1, keepdims=True), approx=True)
        if with_weights:
            w_sum = w_sum + p
        p_bf = p.astype(jnp.bfloat16)

        # context: accumulate over the same causally-reachable key tiles
        ctxacc_s[...] = jnp.zeros_like(ctxacc_s)
        for kj in range(nkv):
            k0 = kj * tq

            @pl.when(kj <= qi)
            def _ctx(k0=k0, p_bf=p_bf, c_lo=c_lo, c_hi=c_hi):
                ctxacc_s[...] += jnp.dot(p_bf[:, k0:k0 + tq],
                                         v_s[k0:k0 + tq, c_lo:c_hi],
                                         preferred_element_type=jnp.float32)
        ctx_s[:, c_lo:c_hi] = ctxacc_s[...].astype(jnp.bfloat16)

    # single full-depth (K = D) output projection -> full MXU fill
    attn_out = jnp.dot(ctx_s[...], wo_ref[...],
                       preferred_element_type=jnp.float32) + bo_ref[0]
    # residual uses the LayerNormed x -- exactly as the PyTorch forward is written
    x2 = xn_q + attn_out                                             # (tq, D) f32

    # ---- feed-forward block (pre-LN, exact erf GELU, f32 residual math) -----
    x2n = _layernorm(x2, g_ff_ref[0], b_ff_ref[0])
    h1 = jnp.dot(x2n.astype(jnp.bfloat16), w1_ref[...],
                 preferred_element_type=jnp.float32) + b1_ref[0]
    h1 = _gelu_exact(h1)
    h2 = jnp.dot(h1.astype(jnp.bfloat16), w2_ref[...],
                 preferred_element_type=jnp.float32) + b2_ref[0]

    y_ref[0] = (x2 + h2).astype(y_ref.dtype)
    if with_weights:
        # TODO(synk): a bf16 weight output (or skipping it) halves/removes the
        # O(L^2) HBM writeback; kept f32 here to match the reference check.
        attnw_ref[0] = (w_sum * (1.0 / H)).astype(attnw_ref.dtype)


def _pick_tq(L):
    """Query/key tile size: full L when small, else an MXU-friendly divisor."""
    if L <= 256:
        return L
    for t in (512, 256, 128):
        if L % t == 0:
            return t
    for t in range(256, 7, -8):          # last resort: a multiple of 8 dividing L
        if L % t == 0:
            return t
    return L


def _vmem_limit_bytes():
    cap = 64 * 1024 * 1024
    try:
        cap = int(pltpu.get_tpu_info().vmem_capacity_bytes)
    except Exception:
        pass
    # ~7/8 of physical VMEM: ~56 MiB on v7x, ~112 MiB on v5e/v6e.
    return int(cap * 7 // 8)


def transformer_causal_layer(x, params, n_heads, *, tq=None, return_attn_weights=True):
    """x: (B, L, D) float32. Returns (y: (B,L,D) f32, attn_weights: (B,L,L) f32)."""
    B, L, D = x.shape
    F = params["w1"].shape[1]
    assert D % n_heads == 0, "d_model must be divisible by n_heads"
    dh = D // n_heads
    if tq is None:
        tq = _pick_tq(L)
    assert L % tq == 0 and (tq == L or tq % 8 == 0)
    nq = L // tq

    f32, bf16 = jnp.float32, jnp.bfloat16
    wq = params["wq"].astype(bf16)
    wk = params["wk"].astype(bf16)
    wv = params["wv"].astype(bf16)
    wo = params["wo"].astype(bf16)
    w1 = params["w1"].astype(bf16)
    w2 = params["w2"].astype(bf16)

    def wspec(shape):
        # grid-invariant weights/biases: single buffer (no wasted double buffer)
        nd = len(shape)
        return pl.BlockSpec(shape, lambda b, q, _nd=nd: (0,) * _nd,
                            pipeline_mode=pl.Buffered(1))

    in_specs = [
        pl.BlockSpec((1, L, D), lambda b, q: (b, 0, 0)),   # x (bf16), full seq per b
        wspec((D, D)), wspec((D, D)), wspec((D, D)),       # wq, wk, wv
        wspec((1, D)), wspec((1, D)), wspec((1, D)),       # bq, bk, bv
        wspec((D, D)), wspec((1, D)),                      # wo, bo
        wspec((1, D)), wspec((1, D)),                      # attn_ln gamma/beta
        wspec((1, D)), wspec((1, D)),                      # ff_ln gamma/beta
        wspec((D, F)), wspec((1, F)),                      # w1, b1
        wspec((F, D)), wspec((1, D)),                      # w2, b2
    ]
    out_specs = [pl.BlockSpec((1, tq, D), lambda b, q: (b, q, 0))]
    out_shape = [jax.ShapeDtypeStruct((B, L, D), f32)]
    if return_attn_weights:
        out_specs.append(pl.BlockSpec((1, tq, L), lambda b, q: (b, q, 0)))
        out_shape.append(jax.ShapeDtypeStruct((B, L, L), f32))

    scratch_shapes = [
        pltpu.VMEM((L, D), f32),      # xn (f32: feeds the residual)
        pltpu.VMEM((L, D), bf16),     # q, pre-scaled
        pltpu.VMEM((D, L), bf16),     # k^T
        pltpu.VMEM((L, D), bf16),     # v
        pltpu.VMEM((tq, L), f32),     # per-head score row (masked region = _MASK)
        pltpu.VMEM((tq, D), bf16),    # concatenated per-head context
        pltpu.VMEM((tq, dh), f32),    # per-head context accumulator
    ]

    kernel = functools.partial(transformer_causal_kernel,
                               n_heads=n_heads, tq=tq,
                               with_weights=return_attn_weights)

    outs = pl.pallas_call(
        kernel,
        grid=(B, nq),
        in_specs=in_specs,
        out_specs=out_specs,
        out_shape=out_shape,
        scratch_shapes=scratch_shapes,
        compiler_params=pltpu.CompilerParams(
            # qi must be 'arbitrary': the K/V/xn scratch filled at qi==0 is
            # carried across query blocks of the same batch row.
            dimension_semantics=("parallel", "arbitrary"),
            vmem_limit_bytes=_vmem_limit_bytes()),
    )(
        x.astype(bf16),
        wq, wk, wv,
        params["bq"].astype(f32), params["bk"].astype(f32), params["bv"].astype(f32),
        wo, params["bo"].astype(f32),
        params["g_attn"].astype(f32), params["b_attn"].astype(f32),
        params["g_ff"].astype(f32), params["b_ff"].astype(f32),
        w1, params["b1"].astype(f32),
        w2, params["b2"].astype(f32),
    )
    if return_attn_weights:
        return outs[0], outs[1]
    return outs[0]


# ---------------------------------------------------------------------------
# plain-JAX f32 reference (same math) for a correctness sanity check
# ---------------------------------------------------------------------------
def reference(x, params, n_heads):
    B, L, D = x.shape
    dh = D // n_heads
    scale = 1.0 / math.sqrt(dh)

    def ln(v, g, b, eps=1e-5):
        m = jnp.mean(v, -1, keepdims=True)
        var = jnp.mean((v - m) ** 2, -1, keepdims=True)
        return (v - m) * jax.lax.rsqrt(var + eps) * g + b

    xn = ln(x, params["g_attn"][0], params["b_attn"][0])
    q = xn @ params["wq"] + params["bq"][0]
    k = xn @ params["wk"] + params["bk"][0]
    v = xn @ params["wv"] + params["bv"][0]
    qh = q.reshape(B, L, n_heads, dh)
    kh = k.reshape(B, L, n_heads, dh)
    vh = v.reshape(B, L, n_heads, dh)
    s = jnp.einsum("bqhd,bkhd->bhqk", qh, kh) * scale
    mask = jnp.arange(L)[None, :] <= jnp.arange(L)[:, None]
    s = jnp.where(mask[None, None], s, -jnp.inf)
    p = jax.nn.softmax(s, axis=-1)
    ctx = jnp.einsum("bhqk,bkhd->bqhd", p, vh).reshape(B, L, D)
    attn = ctx @ params["wo"] + params["bo"][0]
    x2 = xn + attn
    x2n = ln(x2, params["g_ff"][0], params["b_ff"][0])
    h1 = jax.nn.gelu(x2n @ params["w1"] + params["b1"][0], approximate=False)
    y = x2 + h1 @ params["w2"] + params["b2"][0]
    return y, jnp.mean(p, axis=1)


if __name__ == "__main__":
    def rnd(k, shape, scale=0.1):
        return (scale * jax.random.normal(k, shape)).astype(jnp.float32)

    def make_params(key, d_model, d_ff):
        ks = jax.random.split(key, 16)
        return {
            "wq": rnd(ks[0], (d_model, d_model)),
            "wk": rnd(ks[1], (d_model, d_model)),
            "wv": rnd(ks[2], (d_model, d_model)),
            "bq": rnd(ks[3], (1, d_model)),
            "bk": rnd(ks[4], (1, d_model)),
            "bv": rnd(ks[5], (1, d_model)),
            "wo": rnd(ks[6], (d_model, d_model)),
            "bo": rnd(ks[7], (1, d_model)),
            "g_attn": 1.0 + rnd(ks[8], (1, d_model)),
            "b_attn": rnd(ks[9], (1, d_model)),
            "g_ff": 1.0 + rnd(ks[10], (1, d_model)),
            "b_ff": rnd(ks[11], (1, d_model)),
            "w1": rnd(ks[12], (d_model, d_ff)),
            "b1": rnd(ks[13], (1, d_ff)),
            "w2": rnd(ks[14], (d_ff, d_model)),
            "b2": rnd(ks[15], (1, d_model)),
        }

    root = jax.random.PRNGKey(0)
    k1, k2, k3, k4 = jax.random.split(root, 4)

    # --- test 1: module-scale shapes (single query block) --------------------
    B, L, d_model, n_heads, d_ff = 2, 8, 32, 4, 64
    params = make_params(k1, d_model, d_ff)
    x = jax.random.normal(k2, (B, L, d_model)).astype(jnp.float32)
    y, attn_w = transformer_causal_layer(x, params, n_heads)
    jax.block_until_ready((y, attn_w))
    y_ref, w_ref = reference(x, params, n_heads)
    # tolerance covers bf16 input/matmul operands (f32 accumulation) + approx recip
    assert jnp.allclose(y, y_ref, atol=3e-2, rtol=3e-2), "output mismatch (test 1)"
    assert jnp.allclose(attn_w, w_ref, atol=3e-2, rtol=3e-2), "attn weights mismatch (test 1)"

    # --- test 2: tiled query/key path (nq > 1): exercises the per-batch K/V
    #             cache refill, the causal key-tile skip and block output maps --
    B2, L2, d2, h2, f2 = 2, 64, 32, 4, 64
    params2 = make_params(k3, d2, f2)
    x2 = jax.random.normal(k4, (B2, L2, d2)).astype(jnp.float32)
    y2, w2 = transformer_causal_layer(x2, params2, h2, tq=16)
    jax.block_until_ready((y2, w2))
    y2_ref, w2_ref = reference(x2, params2, h2)
    assert jnp.allclose(y2, y2_ref, atol=3e-2, rtol=3e-2), "output mismatch (test 2)"
    assert jnp.allclose(w2, w2_ref, atol=3e-2, rtol=3e-2), "attn weights mismatch (test 2)"

    print("KERNEL_OK")
</pallas_src>

<mosaic_0001>
module attributes {stable_mosaic.version = 11 : i64} {
  func.func @transformer_causal_kernel(%arg0: i32, %arg1: i32, %arg2: memref<1x8x32xbf16, #tpu.memory_space<vmem>>, %arg3: memref<32x32xbf16, #tpu.memory_space<vmem>>, %arg4: memref<32x32xbf16, #tpu.memory_space<vmem>>, %arg5: memref<32x32xbf16, #tpu.memory_space<vmem>>, %arg6: memref<1x32xf32, #tpu.memory_space<vmem>>, %arg7: memref<1x32xf32, #tpu.memory_space<vmem>>, %arg8: memref<1x32xf32, #tpu.memory_space<vmem>>, %arg9: memref<32x32xbf16, #tpu.memory_space<vmem>>, %arg10: memref<1x32xf32, #tpu.memory_space<vmem>>, %arg11: memref<1x32xf32, #tpu.memory_space<vmem>>, %arg12: memref<1x32xf32, #tpu.memory_space<vmem>>, %arg13: memref<1x32xf32, #tpu.memory_space<vmem>>, %arg14: memref<1x32xf32, #tpu.memory_space<vmem>>, %arg15: memref<32x64xbf16, #tpu.memory_space<vmem>>, %arg16: memref<1x64xf32, #tpu.memory_space<vmem>>, %arg17: memref<64x32xbf16, #tpu.memory_space<vmem>>, %arg18: memref<1x32xf32, #tpu.memory_space<vmem>>, %arg19: memref<1x8x32xf32, #tpu.memory_space<vmem>>, %arg20: memref<1x8x8xf32, #tpu.memory_space<vmem>>, %arg21: memref<8x32xf32, #tpu.memory_space<vmem>>, %arg22: memref<8x32xbf16, #tpu.memory_space<vmem>>, %arg23: memref<32x8xbf16, #tpu.memory_space<vmem>>, %arg24: memref<8x32xbf16, #tpu.memory_space<vmem>>, %arg25: memref<8x8xf32, #tpu.memory_space<vmem>>, %arg26: memref<8x32xbf16, #tpu.memory_space<vmem>>, %arg27: memref<8x8xf32, #tpu.memory_space<vmem>>) attributes {dimension_semantics = [#tpu.dimension_semantics<parallel>, #tpu.dimension_semantics<arbitrary>], iteration_bounds = array<i64: 2, 1>, scalar_prefetch = 0 : i64, scratch_operands = 7 : i64, tpu.core_type = #tpu.core_type<tc>, window_params = [{transform_indices = @transform_0, window_bounds = array<i64: 1, 8, 32>}, {pipeline_mode = #tpu.pipeline_mode<synchronous>, transform_indices = @transform_1, window_bounds = array<i64: 32, 32>}, {pipeline_mode = #tpu.pipeline_mode<synchronous>, transform_indices = @transform_2, window_bounds = array<i64: 32, 32>}, {pipeline_mode = #tpu.pipeline_mode<synchronous>, transform_indices = @transform_3, window_bounds = array<i64: 32, 32>}, {pipeline_mode = #tpu.pipeline_mode<synchronous>, transform_indices = @transform_4, window_bounds = array<i64: 1, 32>}, {pipeline_mode = #tpu.pipeline_mode<synchronous>, transform_indices = @transform_5, window_bounds = array<i64: 1, 32>}, {pipeline_mode = #tpu.pipeline_mode<synchronous>, transform_indices = @transform_6, window_bounds = array<i64: 1, 32>}, {pipeline_mode = #tpu.pipeline_mode<synchronous>, transform_indices = @transform_7, window_bounds = array<i64: 32, 32>}, {pipeline_mode = #tpu.pipeline_mode<synchronous>, transform_indices = @transform_8, window_bounds = array<i64: 1, 32>}, {pipeline_mode = #tpu.pipeline_mode<synchronous>, transform_indices = @transform_9, window_bounds = array<i64: 1, 32>}, {pipeline_mode = #tpu.pipeline_mode<synchronous>, transform_indices = @transform_10, window_bounds = array<i64: 1, 32>}, {pipeline_mode = #tpu.pipeline_mode<synchronous>, transform_indices = @transform_11, window_bounds = array<i64: 1, 32>}, {pipeline_mode = #tpu.pipeline_mode<synchronous>, transform_indices = @transform_12, window_bounds = array<i64: 1, 32>}, {pipeline_mode = #tpu.pipeline_mode<synchronous>, transform_indices = @transform_13, window_bounds = array<i64: 32, 64>}, {pipeline_mode = #tpu.pipeline_mode<synchronous>, transform_indices = @transform_14, window_bounds = array<i64: 1, 64>}, {pipeline_mode = #tpu.pipeline_mode<synchronous>, transform_indices = @transform_15, window_bounds = array<i64: 64, 32>}, {pipeline_mode = #tpu.pipeline_mode<synchronous>, transform_indices = @transform_16, window_bounds = array<i64: 1, 32>}, {transform_indices = @transform_17, window_bounds = array<i64: 1, 8, 32>}, {transform_indices = @transform_18, window_bounds = array<i64: 1, 8, 8>}]} {
    %c0_i32 = arith.constant 0 : i32
    %0 = arith.cmpi eq, %arg1, %c0_i32 : i32
    %1 = arith.extui %0 : i1 to i32
    %c0_i32_0 = arith.constant 0 : i32
    %2 = arith.cmpi ne, %1, %c0_i32_0 : i32
    scf.if %2 {
      %c0_111 = arith.constant 0 : index
      %c0_112 = arith.constant 0 : index
      %c0_113 = arith.constant 0 : index
      %215 = vector.load %arg2[%c0_111, %c0_112, %c0_113] : memref<1x8x32xbf16, #tpu.memory_space<vmem>>, vector<1x8x32xbf16>
      %216 = vector.shape_cast %215 : vector<1x8x32xbf16> to vector<8x32xbf16>
      %217 = arith.extf %216 : vector<8x32xbf16> to vector<8x32xf32>
      %c0_114 = arith.constant 0 : index
      %c0_115 = arith.constant 0 : index
      %218 = vector.load %arg11[%c0_114, %c0_115] : memref<1x32xf32, #tpu.memory_space<vmem>>, vector<1x32xf32>
      %219 = vector.shape_cast %218 : vector<1x32xf32> to vector<32xf32>
      %c0_116 = arith.constant 0 : index
      %c0_117 = arith.constant 0 : index
      %220 = vector.load %arg12[%c0_116, %c0_117] : memref<1x32xf32, #tpu.memory_space<vmem>>, vector<1x32xf32>
      %221 = vector.shape_cast %220 : vector<1x32xf32> to vector<32xf32>
      %cst_118 = arith.constant dense<0.000000e+00> : vector<8xf32>
      %222 = vector.multi_reduction <add>, %217, %cst_118 [1] : vector<8x32xf32> to vector<8xf32>
      %223 = vector.shape_cast %222 : vector<8xf32> to vector<8x1xf32>
      %cst_119 = arith.constant 3.200000e+01 : f32
      %224 = vector.broadcast %cst_119 : f32 to vector<8x1xf32>
      %225 = arith.divf %223, %224 : vector<8x1xf32>
      %226 = vector.broadcast %225 : vector<8x1xf32> to vector<8x32xf32>
      %227 = arith.subf %217, %226 : vector<8x32xf32>
      %228 = arith.mulf %227, %227 : vector<8x32xf32>
      %cst_120 = arith.constant dense<0.000000e+00> : vector<8xf32>
      %229 = vector.multi_reduction <add>, %228, %cst_120 [1] : vector<8x32xf32> to vector<8xf32>
      %230 = vector.shape_cast %229 : vector<8xf32> to vector<8x1xf32>
      %cst_121 = arith.constant 3.200000e+01 : f32
      %231 = vector.broadcast %cst_121 : f32 to vector<8x1xf32>
      %232 = arith.divf %230, %231 : vector<8x1xf32>
      %233 = vector.broadcast %225 : vector<8x1xf32> to vector<8x32xf32>
      %234 = arith.subf %217, %233 : vector<8x32xf32>
      %cst_122 = arith.constant 9.99999974E-6 : f32
      %235 = vector.broadcast %cst_122 : f32 to vector<8x1xf32>
      %236 = arith.addf %232, %235 : vector<8x1xf32>
      %237 = math.rsqrt %236 : vector<8x1xf32>
      %238 = vector.broadcast %237 : vector<8x1xf32> to vector<8x32xf32>
      %239 = arith.mulf %234, %238 : vector<8x32xf32>
      %240 = vector.shape_cast %219 : vector<32xf32> to vector<1x32xf32>
      %241 = vector.broadcast %240 : vector<1x32xf32> to vector<8x32xf32>
      %242 = arith.mulf %239, %241 : vector<8x32xf32>
      %243 = vector.shape_cast %221 : vector<32xf32> to vector<1x32xf32>
      %244 = vector.broadcast %243 : vector<1x32xf32> to vector<8x32xf32>
      %245 = arith.addf %242, %244 : vector<8x32xf32>
      %c0_123 = arith.constant 0 : index
      %c0_124 = arith.constant 0 : index
      %246 = vector.load %arg21[%c0_123, %c0_124] : memref<8x32xf32, #tpu.memory_space<vmem>>, vector<8x32xf32>
      tpu.vector_store %arg21[%c0_123, %c0_124], %245 {strides = array<i32>} : memref<8x32xf32, #tpu.memory_space<vmem>>, vector<8x32xf32>,
      %247 = arith.truncf %245 : vector<8x32xf32> to vector<8x32xbf16>
      %c0_125 = arith.constant 0 : index
      %c0_126 = arith.constant 0 : index
      %248 = vector.load %arg3[%c0_125, %c0_126] : memref<32x32xbf16, #tpu.memory_space<vmem>>, vector<32x32xbf16>
      %cst_127 = arith.constant dense<0.000000e+00> : vector<8x32xf32>
      %249 = tpu.matmul %247, %248, %cst_127 {dimension_numbers = #tpu.dot_dimension_numbers<[1], [0], [0], [1], [0, 0, 1, 1], [], []>} : vector<8x32xbf16>, vector<32x32xbf16>, vector<8x32xf32> -> vector<8x32xf32>
      %c0_128 = arith.constant 0 : index
      %c0_129 = arith.constant 0 : index
      %250 = vector.load %arg6[%c0_128, %c0_129] : memref<1x32xf32, #tpu.memory_space<vmem>>, vector<1x32xf32>
      %251 = vector.shape_cast %250 : vector<1x32xf32> to vector<32xf32>
      %252 = vector.shape_cast %251 : vector<32xf32> to vector<1x32xf32>
      %253 = vector.broadcast %252 : vector<1x32xf32> to vector<8x32xf32>
      %254 = arith.addf %249, %253 : vector<8x32xf32>
      %cst_130 = arith.constant 0.353553385 : f32
      %255 = vector.broadcast %cst_130 : f32 to vector<8x32xf32>
      %256 = arith.mulf %254, %255 : vector<8x32xf32>
      %257 = arith.truncf %256 : vector<8x32xf32> to vector<8x32xbf16>
      %c0_131 = arith.constant 0 : index
      %c0_132 = arith.constant 0 : index
      %258 = vector.load %arg22[%c0_131, %c0_132] : memref<8x32xbf16, #tpu.memory_space<vmem>>, vector<8x32xbf16>
      tpu.vector_store %arg22[%c0_131, %c0_132], %257 {strides = array<i32>} : memref<8x32xbf16, #tpu.memory_space<vmem>>, vector<8x32xbf16>,
      %c0_133 = arith.constant 0 : index
      %c0_134 = arith.constant 0 : index
      %259 = vector.load %arg4[%c0_133, %c0_134] : memref<32x32xbf16, #tpu.memory_space<vmem>>, vector<32x32xbf16>
      %cst_135 = arith.constant dense<0.000000e+00> : vector<8x32xf32>
      %260 = tpu.matmul %247, %259, %cst_135 {dimension_numbers = #tpu.dot_dimension_numbers<[1], [0], [0], [1], [0, 0, 1, 1], [], []>} : vector<8x32xbf16>, vector<32x32xbf16>, vector<8x32xf32> -> vector<8x32xf32>
      %c0_136 = arith.constant 0 : index
      %c0_137 = arith.constant 0 : index
      %261 = vector.load %arg7[%c0_136, %c0_137] : memref<1x32xf32, #tpu.memory_space<vmem>>, vector<1x32xf32>
      %262 = vector.shape_cast %261 : vector<1x32xf32> to vector<32xf32>
      %263 = vector.shape_cast %262 : vector<32xf32> to vector<1x32xf32>
      %264 = vector.broadcast %263 : vector<1x32xf32> to vector<8x32xf32>
      %265 = arith.addf %260, %264 : vector<8x32xf32>
      %266 = tpu.transpose %265, [1, 0] : vector<8x32xf32> -> vector<32x8xf32>
      %267 = arith.truncf %266 : vector<32x8xf32> to vector<32x8xbf16>
      %c0_138 = arith.constant 0 : index
      %c0_139 = arith.constant 0 : index
      %268 = vector.load %arg23[%c0_138, %c0_139] : memref<32x8xbf16, #tpu.memory_space<vmem>>, vector<32x8xbf16>
      tpu.vector_store %arg23[%c0_138, %c0_139], %267 {strides = array<i32>} : memref<32x8xbf16, #tpu.memory_space<vmem>>, vector<32x8xbf16>,
      %c0_140 = arith.constant 0 : index
      %c0_141 = arith.constant 0 : index
      %269 = vector.load %arg5[%c0_140, %c0_141] : memref<32x32xbf16, #tpu.memory_space<vmem>>, vector<32x32xbf16>
      %cst_142 = arith.constant dense<0.000000e+00> : vector<8x32xf32>
      %270 = tpu.matmul %247, %269, %cst_142 {dimension_numbers = #tpu.dot_dimension_numbers<[1], [0], [0], [1], [0, 0, 1, 1], [], []>} : vector<8x32xbf16>, vector<32x32xbf16>, vector<8x32xf32> -> vector<8x32xf32>
      %c0_143 = arith.constant 0 : index
      %c0_144 = arith.constant 0 : index
      %271 = vector.load %arg8[%c0_143, %c0_144] : memref<1x32xf32, #tpu.memory_space<vmem>>, vector<1x32xf32>
      %272 = vector.shape_cast %271 : vector<1x32xf32> to vector<32xf32>
      %273 = vector.shape_cast %272 : vector<32xf32> to vector<1x32xf32>
      %274 = vector.broadcast %273 : vector<1x32xf32> to vector<8x32xf32>
      %275 = arith.addf %270, %274 : vector<8x32xf32>
      %276 = arith.truncf %275 : vector<8x32xf32> to vector<8x32xbf16>
      %c0_145 = arith.constant 0 : index
      %c0_146 = arith.constant 0 : index
      %277 = vector.load %arg24[%c0_145, %c0_146] : memref<8x32xbf16, #tpu.memory_space<vmem>>, vector<8x32xbf16>
      tpu.vector_store %arg24[%c0_145, %c0_146], %276 {strides = array<i32>} : memref<8x32xbf16, #tpu.memory_space<vmem>>, vector<8x32xbf16>,
    } else {
    }
    %c8_i32 = arith.constant 8 : i32
    %3 = arith.muli %arg1, %c8_i32 : i32
    %4 = tpu.assume_multiple %3, 8 : i32
    %5 = arith.index_cast %4 : i32 to index
    %c0 = arith.constant 0 : index
    %6 = vector.load %arg21[%5, %c0] : memref<8x32xf32, #tpu.memory_space<vmem>>, vector<8x32xf32>
    %7 = arith.index_cast %4 : i32 to index
    %c0_1 = arith.constant 0 : index
    %8 = vector.load %arg22[%7, %c0_1] : memref<8x32xbf16, #tpu.memory_space<vmem>>, vector<8x32xbf16>
    %cst = arith.constant -1.000000e+30 : f32
    %9 = vector.broadcast %cst : f32 to vector<8x8xf32>
    %c0_2 = arith.constant 0 : index
    %c0_3 = arith.constant 0 : index
    %10 = vector.load %arg25[%c0_2, %c0_3] : memref<8x8xf32, #tpu.memory_space<vmem>>, vector<8x8xf32>
    tpu.vector_store %arg25[%c0_2, %c0_3], %9 {strides = array<i32>} : memref<8x8xf32, #tpu.memory_space<vmem>>, vector<8x8xf32>,
    %cst_4 = arith.constant 0.000000e+00 : f32
    %11 = vector.broadcast %cst_4 : f32 to vector<8x8xf32>
    %12 = vector.extract_strided_slice %8 {offsets = [0, 0], sizes = [8, 8], strides = [1, 1]} : vector<8x32xbf16> to vector<8x8xbf16>
    %c0_i32_5 = arith.constant 0 : i32
    %13 = arith.cmpi sge, %arg1, %c0_i32_5 : i32
    %14 = arith.extui %13 : i1 to i32
    %c0_i32_6 = arith.constant 0 : i32
    %15 = arith.cmpi ne, %14, %c0_i32_6 : i32
    scf.if %15 {
      %c0_111 = arith.constant 0 : index
      %c0_112 = arith.constant 0 : index
      %215 = vector.load %arg23[%c0_111, %c0_112] : memref<32x8xbf16, #tpu.memory_space<vmem>>, vector<8x8xbf16>
      %cst_113 = arith.constant dense<0.000000e+00> : vector<8x8xf32>
      %216 = tpu.matmul %12, %215, %cst_113 {dimension_numbers = #tpu.dot_dimension_numbers<[1], [0], [0], [1], [0, 0, 1, 1], [], []>} : vector<8x8xbf16>, vector<8x8xbf16>, vector<8x8xf32> -> vector<8x8xf32>
      %217 = tpu.iota {dimensions = array<i32: 0>} : vector<8x8xi32>
      %218 = vector.broadcast %4 : i32 to vector<8x8xi32>
      %219 = arith.addi %218, %217 : vector<8x8xi32>
      %220 = tpu.iota {dimensions = array<i32: 1>} : vector<8x8xi32>
      %c0_i32_114 = arith.constant 0 : i32
      %221 = vector.broadcast %c0_i32_114 : i32 to vector<8x8xi32>
      %222 = arith.addi %221, %220 : vector<8x8xi32>
      %223 = arith.cmpi sle, %222, %219 : vector<8x8xi32>
      %cst_115 = arith.constant -1.000000e+30 : f32
      %224 = vector.broadcast %cst_115 : f32 to vector<8x8xf32>
      %225 = arith.select %223, %216, %224 : vector<8x8xi1>, vector<8x8xf32>
      %c0_116 = arith.constant 0 : index
      %c0_117 = arith.constant 0 : index
      %226 = vector.load %arg25[%c0_116, %c0_117] : memref<8x8xf32, #tpu.memory_space<vmem>>, vector<8x8xf32>
      tpu.vector_store %arg25[%c0_116, %c0_117], %225 {strides = array<i32>} : memref<8x8xf32, #tpu.memory_space<vmem>>, vector<8x8xf32>,
    } else {
    }
    %c0_7 = arith.constant 0 : index
    %c0_8 = arith.constant 0 : index
    %16 = vector.load %arg25[%c0_7, %c0_8] : memref<8x8xf32, #tpu.memory_space<vmem>>, vector<8x8xf32>
    %cst_9 = arith.constant dense<0xFF800000> : vector<8xf32>
    %17 = vector.multi_reduction <maximumf>, %16, %cst_9 [1] : vector<8x8xf32> to vector<8xf32>
    %18 = vector.shape_cast %17 : vector<8xf32> to vector<8x1xf32>
    %19 = vector.broadcast %18 : vector<8x1xf32> to vector<8x8xf32>
    %20 = arith.subf %16, %19 : vector<8x8xf32>
    %21 = math.exp %20 : vector<8x8xf32>
    %cst_10 = arith.constant dense<0.000000e+00> : vector<8xf32>
    %22 = vector.multi_reduction <add>, %21, %cst_10 [1] : vector<8x8xf32> to vector<8xf32>
    %23 = vector.shape_cast %22 : vector<8xf32> to vector<8x1xf32>
    %24 = tpu.reciprocal %23 {approx = true} : vector<8x1xf32> -> vector<8x1xf32>
    %25 = vector.broadcast %24 : vector<8x1xf32> to vector<8x8xf32>
    %26 = arith.mulf %21, %25 : vector<8x8xf32>
    %27 = arith.addf %11, %26 : vector<8x8xf32>
    %28 = arith.truncf %26 : vector<8x8xf32> to vector<8x8xbf16>
    %cst_11 = arith.constant 0.000000e+00 : f32
    %29 = vector.broadcast %cst_11 : f32 to vector<8x8xf32>
    %c0_12 = arith.constant 0 : index
    %c0_13 = arith.constant 0 : index
    %30 = vector.load %arg27[%c0_12, %c0_13] : memref<8x8xf32, #tpu.memory_space<vmem>>, vector<8x8xf32>
    tpu.vector_store %arg27[%c0_12, %c0_13], %29 {strides = array<i32>} : memref<8x8xf32, #tpu.memory_space<vmem>>, vector<8x8xf32>,
    %c0_i32_14 = arith.constant 0 : i32
    %31 = arith.cmpi sge, %arg1, %c0_i32_14 : i32
    %32 = arith.extui %31 : i1 to i32
    %c0_i32_15 = arith.constant 0 : i32
    %33 = arith.cmpi ne, %32, %c0_i32_15 : i32
    scf.if %33 {
      %c0_111 = arith.constant 0 : index
      %c0_112 = arith.constant 0 : index
      %215 = vector.load %arg27[%c0_111, %c0_112] : memref<8x8xf32, #tpu.memory_space<vmem>>, vector<8x8xf32>
      %c0_113 = arith.constant 0 : index
      %c0_114 = arith.constant 0 : index
      %216 = vector.load %arg24[%c0_113, %c0_114] : memref<8x32xbf16, #tpu.memory_space<vmem>>, vector<8x8xbf16>
      %cst_115 = arith.constant dense<0.000000e+00> : vector<8x8xf32>
      %217 = tpu.matmul %28, %216, %cst_115 {dimension_numbers = #tpu.dot_dimension_numbers<[1], [0], [0], [1], [0, 0, 1, 1], [], []>} : vector<8x8xbf16>, vector<8x8xbf16>, vector<8x8xf32> -> vector<8x8xf32>
      %218 = arith.addf %215, %217 : vector<8x8xf32>
      %c0_116 = arith.constant 0 : index
      %c0_117 = arith.constant 0 : index
      %219 = vector.load %arg27[%c0_116, %c0_117] : memref<8x8xf32, #tpu.memory_space<vmem>>, vector<8x8xf32>
      tpu.vector_store %arg27[%c0_116, %c0_117], %218 {strides = array<i32>} : memref<8x8xf32, #tpu.memory_space<vmem>>, vector<8x8xf32>,
    } else {
    }
    %c0_16 = arith.constant 0 : index
    %c0_17 = arith.constant 0 : index
    %34 = vector.load %arg27[%c0_16, %c0_17] : memref<8x8xf32, #tpu.memory_space<vmem>>, vector<8x8xf32>
    %35 = arith.truncf %34 : vector<8x8xf32> to vector<8x8xbf16>
    %c0_18 = arith.constant 0 : index
    %c0_19 = arith.constant 0 : index
    %36 = vector.load %arg26[%c0_18, %c0_19] : memref<8x32xbf16, #tpu.memory_space<vmem>>, vector<8x8xbf16>
    tpu.vector_store %arg26[%c0_18, %c0_19], %35 {strides = array<i32>} : memref<8x32xbf16, #tpu.memory_space<vmem>>, vector<8x8xbf16>,
    %37 = vector.extract_strided_slice %8 {offsets = [0, 8], sizes = [8, 8], strides = [1, 1]} : vector<8x32xbf16> to vector<8x8xbf16>
    %c0_i32_20 = arith.constant 0 : i32
    %38 = arith.cmpi sge, %arg1, %c0_i32_20 : i32
    %39 = arith.extui %38 : i1 to i32
    %c0_i32_21 = arith.constant 0 : i32
    %40 = arith.cmpi ne, %39, %c0_i32_21 : i32
    scf.if %40 {
      %c8_111 = arith.constant 8 : index
      %c0_112 = arith.constant 0 : index
      %215 = vector.load %arg23[%c8_111, %c0_112] : memref<32x8xbf16, #tpu.memory_space<vmem>>, vector<8x8xbf16>
      %cst_113 = arith.constant dense<0.000000e+00> : vector<8x8xf32>
      %216 = tpu.matmul %37, %215, %cst_113 {dimension_numbers = #tpu.dot_dimension_numbers<[1], [0], [0], [1], [0, 0, 1, 1], [], []>} : vector<8x8xbf16>, vector<8x8xbf16>, vector<8x8xf32> -> vector<8x8xf32>
      %217 = tpu.iota {dimensions = array<i32: 0>} : vector<8x8xi32>
      %218 = vector.broadcast %4 : i32 to vector<8x8xi32>
      %219 = arith.addi %218, %217 : vector<8x8xi32>
      %220 = tpu.iota {dimensions = array<i32: 1>} : vector<8x8xi32>
      %c0_i32_114 = arith.constant 0 : i32
      %221 = vector.broadcast %c0_i32_114 : i32 to vector<8x8xi32>
      %222 = arith.addi %221, %220 : vector<8x8xi32>
      %223 = arith.cmpi sle, %222, %219 : vector<8x8xi32>
      %cst_115 = arith.constant -1.000000e+30 : f32
      %224 = vector.broadcast %cst_115 : f32 to vector<8x8xf32>
      %225 = arith.select %223, %216, %224 : vector<8x8xi1>, vector<8x8xf32>
      %c0_116 = arith.constant 0 : index
      %c0_117 = arith.constant 0 : index
      %226 = vector.load %arg25[%c0_116, %c0_117] : memref<8x8xf32, #tpu.memory_space<vmem>>, vector<8x8xf32>
      tpu.vector_store %arg25[%c0_116, %c0_117], %225 {strides = array<i32>} : memref<8x8xf32, #tpu.memory_space<vmem>>, vector<8x8xf32>,
    } else {
    }
    %c0_22 = arith.constant 0 : index
    %c0_23 = arith.constant 0 : index
    %41 = vector.load %arg25[%c0_22, %c0_23] : memref<8x8xf32, #tpu.memory_space<vmem>>, vector<8x8xf32>
    %cst_24 = arith.constant dense<0xFF800000> : vector<8xf32>
    %42 = vector.multi_reduction <maximumf>, %41, %cst_24 [1] : vector<8x8xf32> to vector<8xf32>
    %43 = vector.shape_cast %42 : vector<8xf32> to vector<8x1xf32>
    %44 = vector.broadcast %43 : vector<8x1xf32> to vector<8x8xf32>
    %45 = arith.subf %41, %44 : vector<8x8xf32>
    %46 = math.exp %45 : vector<8x8xf32>
    %cst_25 = arith.constant dense<0.000000e+00> : vector<8xf32>
    %47 = vector.multi_reduction <add>, %46, %cst_25 [1] : vector<8x8xf32> to vector<8xf32>
    %48 = vector.shape_cast %47 : vector<8xf32> to vector<8x1xf32>
    %49 = tpu.reciprocal %48 {approx = true} : vector<8x1xf32> -> vector<8x1xf32>
    %50 = vector.broadcast %49 : vector<8x1xf32> to vector<8x8xf32>
    %51 = arith.mulf %46, %50 : vector<8x8xf32>
    %52 = arith.addf %27, %51 : vector<8x8xf32>
    %53 = arith.truncf %51 : vector<8x8xf32> to vector<8x8xbf16>
    %cst_26 = arith.constant 0.000000e+00 : f32
    %54 = vector.broadcast %cst_26 : f32 to vector<8x8xf32>
    %c0_27 = arith.constant 0 : index
    %c0_28 = arith.constant 0 : index
    %55 = vector.load %arg27[%c0_27, %c0_28] : memref<8x8xf32, #tpu.memory_space<vmem>>, vector<8x8xf32>
    tpu.vector_store %arg27[%c0_27, %c0_28], %54 {strides = array<i32>} : memref<8x8xf32, #tpu.memory_space<vmem>>, vector<8x8xf32>,
    %c0_i32_29 = arith.constant 0 : i32
    %56 = arith.cmpi sge, %arg1, %c0_i32_29 : i32
    %57 = arith.extui %56 : i1 to i32
    %c0_i32_30 = arith.constant 0 : i32
    %58 = arith.cmpi ne, %57, %c0_i32_30 : i32
    scf.if %58 {
      %c0_111 = arith.constant 0 : index
      %c0_112 = arith.constant 0 : index
      %215 = vector.load %arg27[%c0_111, %c0_112] : memref<8x8xf32, #tpu.memory_space<vmem>>, vector<8x8xf32>
      %c0_113 = arith.constant 0 : index
      %c8_114 = arith.constant 8 : index
      %216 = vector.load %arg24[%c0_113, %c8_114] : memref<8x32xbf16, #tpu.memory_space<vmem>>, vector<8x8xbf16>
      %cst_115 = arith.constant dense<0.000000e+00> : vector<8x8xf32>
      %217 = tpu.matmul %53, %216, %cst_115 {dimension_numbers = #tpu.dot_dimension_numbers<[1], [0], [0], [1], [0, 0, 1, 1], [], []>} : vector<8x8xbf16>, vector<8x8xbf16>, vector<8x8xf32> -> vector<8x8xf32>
      %218 = arith.addf %215, %217 : vector<8x8xf32>
      %c0_116 = arith.constant 0 : index
      %c0_117 = arith.constant 0 : index
      %219 = vector.load %arg27[%c0_116, %c0_117] : memref<8x8xf32, #tpu.memory_space<vmem>>, vector<8x8xf32>
      tpu.vector_store %arg27[%c0_116, %c0_117], %218 {strides = array<i32>} : memref<8x8xf32, #tpu.memory_space<vmem>>, vector<8x8xf32>,
    } else {
    }
    %c0_31 = arith.constant 0 : index
    %c0_32 = arith.constant 0 : index
    %59 = vector.load %arg27[%c0_31, %c0_32] : memref<8x8xf32, #tpu.memory_space<vmem>>, vector<8x8xf32>
    %60 = arith.truncf %59 : vector<8x8xf32> to vector<8x8xbf16>
    %c0_33 = arith.constant 0 : index
    %c8 = arith.constant 8 : index
    %61 = vector.load %arg26[%c0_33, %c8] : memref<8x32xbf16, #tpu.memory_space<vmem>>, vector<8x8xbf16>
    tpu.vector_store %arg26[%c0_33, %c8], %60 {strides = array<i32>} : memref<8x32xbf16, #tpu.memory_space<vmem>>, vector<8x8xbf16>,
    %62 = vector.extract_strided_slice %8 {offsets = [0, 16], sizes = [8, 8], strides = [1, 1]} : vector<8x32xbf16> to vector<8x8xbf16>
    %c0_i32_34 = arith.constant 0 : i32
    %63 = arith.cmpi sge, %arg1, %c0_i32_34 : i32
    %64 = arith.extui %63 : i1 to i32
    %c0_i32_35 = arith.constant 0 : i32
    %65 = arith.cmpi ne, %64, %c0_i32_35 : i32
    scf.if %65 {
      %c16_111 = arith.constant 16 : index
      %c0_112 = arith.constant 0 : index
      %215 = vector.load %arg23[%c16_111, %c0_112] : memref<32x8xbf16, #tpu.memory_space<vmem>>, vector<8x8xbf16>
      %cst_113 = arith.constant dense<0.000000e+00> : vector<8x8xf32>
      %216 = tpu.matmul %62, %215, %cst_113 {dimension_numbers = #tpu.dot_dimension_numbers<[1], [0], [0], [1], [0, 0, 1, 1], [], []>} : vector<8x8xbf16>, vector<8x8xbf16>, vector<8x8xf32> -> vector<8x8xf32>
      %217 = tpu.iota {dimensions = array<i32: 0>} : vector<8x8xi32>
      %218 = vector.broadcast %4 : i32 to vector<8x8xi32>
      %219 = arith.addi %218, %217 : vector<8x8xi32>
      %220 = tpu.iota {dimensions = array<i32: 1>} : vector<8x8xi32>
      %c0_i32_114 = arith.constant 0 : i32
      %221 = vector.broadcast %c0_i32_114 : i32 to vector<8x8xi32>
      %222 = arith.addi %221, %220 : vector<8x8xi32>
      %223 = arith.cmpi sle, %222, %219 : vector<8x8xi32>
      %cst_115 = arith.constant -1.000000e+30 : f32
      %224 = vector.broadcast %cst_115 : f32 to vector<8x8xf32>
      %225 = arith.select %223, %216, %224 : vector<8x8xi1>, vector<8x8xf32>
      %c0_116 = arith.constant 0 : index
      %c0_117 = arith.constant 0 : index
      %226 = vector.load %arg25[%c0_116, %c0_117] : memref<8x8xf32, #tpu.memory_space<vmem>>, vector<8x8xf32>
      tpu.vector_store %arg25[%c0_116, %c0_117], %225 {strides = array<i32>} : memref<8x8xf32, #tpu.memory_space<vmem>>, vector<8x8xf32>,
    } else {
    }
    %c0_36 = arith.constant 0 : index
    %c0_37 = arith.constant 0 : index
    %66 = vector.load %arg25[%c0_36, %c0_37] : memref<8x8xf32, #tpu.memory_space<vmem>>, vector<8x8xf32>
    %cst_38 = arith.constant dense<0xFF800000> : vector<8xf32>
    %67 = vector.multi_reduction <maximumf>, %66, %cst_38 [1] : vector<8x8xf32> to vector<8xf32>
    %68 = vector.shape_cast %67 : vector<8xf32> to vector<8x1xf32>
    %69 = vector.broadcast %68 : vector<8x1xf32> to vector<8x8xf32>
    %70 = arith.subf %66, %69 : vector<8x8xf32>
    %71 = math.exp %70 : vector<8x8xf32>
    %cst_39 = arith.constant dense<0.000000e+00> : vector<8xf32>
    %72 = vector.multi_reduction <add>, %71, %cst_39 [1] : vector<8x8xf32> to vector<8xf32>
    %73 = vector.shape_cast %72 : vector<8xf32> to vector<8x1xf32>
    %74 = tpu.reciprocal %73 {approx = true} : vector<8x1xf32> -> vector<8x1xf32>
    %75 = vector.broadcast %74 : vector<8x1xf32> to vector<8x8xf32>
    %76 = arith.mulf %71, %75 : vector<8x8xf32>
    %77 = arith.addf %52, %76 : vector<8x8xf32>
    %78 = arith.truncf %76 : vector<8x8xf32> to vector<8x8xbf16>
    %cst_40 = arith.constant 0.000000e+00 : f32
    %79 = vector.broadcast %cst_40 : f32 to vector<8x8xf32>
    %c0_41 = arith.constant 0 : index
    %c0_42 = arith.constant 0 : index
    %80 = vector.load %arg27[%c0_41, %c0_42] : memref<8x8xf32, #tpu.memory_space<vmem>>, vector<8x8xf32>
    tpu.vector_store %arg27[%c0_41, %c0_42], %79 {strides = array<i32>} : memref<8x8xf32, #tpu.memory_space<vmem>>, vector<8x8xf32>,
    %c0_i32_43 = arith.constant 0 : i32
    %81 = arith.cmpi sge, %arg1, %c0_i32_43 : i32
    %82 = arith.extui %81 : i1 to i32
    %c0_i32_44 = arith.constant 0 : i32
    %83 = arith.cmpi ne, %82, %c0_i32_44 : i32
    scf.if %83 {
      %c0_111 = arith.constant 0 : index
      %c0_112 = arith.constant 0 : index
      %215 = vector.load %arg27[%c0_111, %c0_112] : memref<8x8xf32, #tpu.memory_space<vmem>>, vector<8x8xf32>
      %c0_113 = arith.constant 0 : index
      %c16_114 = arith.constant 16 : index
      %216 = vector.load %arg24[%c0_113, %c16_114] : memref<8x32xbf16, #tpu.memory_space<vmem>>, vector<8x8xbf16>
      %cst_115 = arith.constant dense<0.000000e+00> : vector<8x8xf32>
      %217 = tpu.matmul %78, %216, %cst_115 {dimension_numbers = #tpu.dot_dimension_numbers<[1], [0], [0], [1], [0, 0, 1, 1], [], []>} : vector<8x8xbf16>, vector<8x8xbf16>, vector<8x8xf32> -> vector<8x8xf32>
      %218 = arith.addf %215, %217 : vector<8x8xf32>
      %c0_116 = arith.constant 0 : index
      %c0_117 = arith.constant 0 : index
      %219 = vector.load %arg27[%c0_116, %c0_117] : memref<8x8xf32, #tpu.memory_space<vmem>>, vector<8x8xf32>
      tpu.vector_store %arg27[%c0_116, %c0_117], %218 {strides = array<i32>} : memref<8x8xf32, #tpu.memory_space<vmem>>, vector<8x8xf32>,
    } else {
    }
    %c0_45 = arith.constant 0 : index
    %c0_46 = arith.constant 0 : index
    %84 = vector.load %arg27[%c0_45, %c0_46] : memref<8x8xf32, #tpu.memory_space<vmem>>, vector<8x8xf32>
    %85 = arith.truncf %84 : vector<8x8xf32> to vector<8x8xbf16>
    %c0_47 = arith.constant 0 : index
    %c16 = arith.constant 16 : index
    %86 = vector.load %arg26[%c0_47, %c16] : memref<8x32xbf16, #tpu.memory_space<vmem>>, vector<8x8xbf16>
    tpu.vector_store %arg26[%c0_47, %c16], %85 {strides = array<i32>} : memref<8x32xbf16, #tpu.memory_space<vmem>>, vector<8x8xbf16>,
    %87 = vector.extract_strided_slice %8 {offsets = [0, 24], sizes = [8, 8], strides = [1, 1]} : vector<8x32xbf16> to vector<8x8xbf16>
    %c0_i32_48 = arith.constant 0 : i32
    %88 = arith.cmpi sge, %arg1, %c0_i32_48 : i32
    %89 = arith.extui %88 : i1 to i32
    %c0_i32_49 = arith.constant 0 : i32
    %90 = arith.cmpi ne, %89, %c0_i32_49 : i32
    scf.if %90 {
      %c24_111 = arith.constant 24 : index
      %c0_112 = arith.constant 0 : index
      %215 = vector.load %arg23[%c24_111, %c0_112] : memref<32x8xbf16, #tpu.memory_space<vmem>>, vector<8x8xbf16>
      %cst_113 = arith.constant dense<0.000000e+00> : vector<8x8xf32>
      %216 = tpu.matmul %87, %215, %cst_113 {dimension_numbers = #tpu.dot_dimension_numbers<[1], [0], [0], [1], [0, 0, 1, 1], [], []>} : vector<8x8xbf16>, vector<8x8xbf16>, vector<8x8xf32> -> vector<8x8xf32>
      %217 = tpu.iota {dimensions = array<i32: 0>} : vector<8x8xi32>
      %218 = vector.broadcast %4 : i32 to vector<8x8xi32>
      %219 = arith.addi %218, %217 : vector<8x8xi32>
      %220 = tpu.iota {dimensions = array<i32: 1>} : vector<8x8xi32>
      %c0_i32_114 = arith.constant 0 : i32
      %221 = vector.broadcast %c0_i32_114 : i32 to vector<8x8xi32>
      %222 = arith.addi %221, %220 : vector<8x8xi32>
      %223 = arith.cmpi sle, %222, %219 : vector<8x8xi32>
      %cst_115 = arith.constant -1.000000e+30 : f32
      %224 = vector.broadcast %cst_115 : f32 to vector<8x8xf32>
      %225 = arith.select %223, %216, %224 : vector<8x8xi1>, vector<8x8xf32>
      %c0_116 = arith.constant 0 : index
      %c0_117 = arith.constant 0 : index
      %226 = vector.load %arg25[%c0_116, %c0_117] : memref<8x8xf32, #tpu.memory_space<vmem>>, vector<8x8xf32>
      tpu.vector_store %arg25[%c0_116, %c0_117], %225 {strides = array<i32>} : memref<8x8xf32, #tpu.memory_space<vmem>>, vector<8x8xf32>,
    } else {
    }
    %c0_50 = arith.constant 0 : index
    %c0_51 = arith.constant 0 : index
    %91 = vector.load %arg25[%c0_50, %c0_51] : memref<8x8xf32, #tpu.memory_space<vmem>>, vector<8x8xf32>
    %cst_52 = arith.constant dense<0xFF800000> : vector<8xf32>
    %92 = vector.multi_reduction <maximumf>, %91, %cst_52 [1] : vector<8x8xf32> to vector<8xf32>
    %93 = vector.shape_cast %92 : vector<8xf32> to vector<8x1xf32>
    %94 = vector.broadcast %93 : vector<8x1xf32> to vector<8x8xf32>
    %95 = arith.subf %91, %94 : vector<8x8xf32>
    %96 = math.exp %95 : vector<8x8xf32>
    %cst_53 = arith.constant dense<0.000000e+00> : vector<8xf32>
    %97 = vector.multi_reduction <add>, %96, %cst_53 [1] : vector<8x8xf32> to vector<8xf32>
    %98 = vector.shape_cast %97 : vector<8xf32> to vector<8x1xf32>
    %99 = tpu.reciprocal %98 {approx = true} : vector<8x1xf32> -> vector<8x1xf32>
    %100 = vector.broadcast %99 : vector<8x1xf32> to vector<8x8xf32>
    %101 = arith.mulf %96, %100 : vector<8x8xf32>
    %102 = arith.addf %77, %101 : vector<8x8xf32>
    %103 = arith.truncf %101 : vector<8x8xf32> to vector<8x8xbf16>
    %cst_54 = arith.constant 0.000000e+00 : f32
    %104 = vector.broadcast %cst_54 : f32 to vector<8x8xf32>
    %c0_55 = arith.constant 0 : index
    %c0_56 = arith.constant 0 : index
    %105 = vector.load %arg27[%c0_55, %c0_56] : memref<8x8xf32, #tpu.memory_space<vmem>>, vector<8x8xf32>
    tpu.vector_store %arg27[%c0_55, %c0_56], %104 {strides = array<i32>} : memref<8x8xf32, #tpu.memory_space<vmem>>, vector<8x8xf32>,
    %c0_i32_57 = arith.constant 0 : i32
    %106 = arith.cmpi sge, %arg1, %c0_i32_57 : i32
    %107 = arith.extui %106 : i1 to i32
    %c0_i32_58 = arith.constant 0 : i32
    %108 = arith.cmpi ne, %107, %c0_i32_58 : i32
    scf.if %108 {
      %c0_111 = arith.constant 0 : index
      %c0_112 = arith.constant 0 : index
      %215 = vector.load %arg27[%c0_111, %c0_112] : memref<8x8xf32, #tpu.memory_space<vmem>>, vector<8x8xf32>
      %c0_113 = arith.constant 0 : index
      %c24_114 = arith.constant 24 : index
      %216 = vector.load %arg24[%c0_113, %c24_114] : memref<8x32xbf16, #tpu.memory_space<vmem>>, vector<8x8xbf16>
      %cst_115 = arith.constant dense<0.000000e+00> : vector<8x8xf32>
      %217 = tpu.matmul %103, %216, %cst_115 {dimension_numbers = #tpu.dot_dimension_numbers<[1], [0], [0], [1], [0, 0, 1, 1], [], []>} : vector<8x8xbf16>, vector<8x8xbf16>, vector<8x8xf32> -> vector<8x8xf32>
      %218 = arith.addf %215, %217 : vector<8x8xf32>
      %c0_116 = arith.constant 0 : index
      %c0_117 = arith.constant 0 : index
      %219 = vector.load %arg27[%c0_116, %c0_117] : memref<8x8xf32, #tpu.memory_space<vmem>>, vector<8x8xf32>
      tpu.vector_store %arg27[%c0_116, %c0_117], %218 {strides = array<i32>} : memref<8x8xf32, #tpu.memory_space<vmem>>, vector<8x8xf32>,
    } else {
    }
    %c0_59 = arith.constant 0 : index
    %c0_60 = arith.constant 0 : index
    %109 = vector.load %arg27[%c0_59, %c0_60] : memref<8x8xf32, #tpu.memory_space<vmem>>, vector<8x8xf32>
    %110 = arith.truncf %109 : vector<8x8xf32> to vector<8x8xbf16>
    %c0_61 = arith.constant 0 : index
    %c24 = arith.constant 24 : index
    %111 = vector.load %arg26[%c0_61, %c24] : memref<8x32xbf16, #tpu.memory_space<vmem>>, vector<8x8xbf16>
    tpu.vector_store %arg26[%c0_61, %c24], %110 {strides = array<i32>} : memref<8x32xbf16, #tpu.memory_space<vmem>>, vector<8x8xbf16>,
    %c0_62 = arith.constant 0 : index
    %c0_63 = arith.constant 0 : index
    %112 = vector.load %arg26[%c0_62, %c0_63] : memref<8x32xbf16, #tpu.memory_space<vmem>>, vector<8x32xbf16>
    %c0_64 = arith.constant 0 : index
    %c0_65 = arith.constant 0 : index
    %113 = vector.load %arg9[%c0_64, %c0_65] : memref<32x32xbf16, #tpu.memory_space<vmem>>, vector<32x32xbf16>
    %cst_66 = arith.constant dense<0.000000e+00> : vector<8x32xf32>
    %114 = tpu.matmul %112, %113, %cst_66 {dimension_numbers = #tpu.dot_dimension_numbers<[1], [0], [0], [1], [0, 0, 1, 1], [], []>} : vector<8x32xbf16>, vector<32x32xbf16>, vector<8x32xf32> -> vector<8x32xf32>
    %c0_67 = arith.constant 0 : index
    %c0_68 = arith.constant 0 : index
    %115 = vector.load %arg10[%c0_67, %c0_68] : memref<1x32xf32, #tpu.memory_space<vmem>>, vector<1x32xf32>
    %116 = vector.shape_cast %115 : vector<1x32xf32> to vector<32xf32>
    %117 = vector.shape_cast %116 : vector<32xf32> to vector<1x32xf32>
    %118 = vector.broadcast %117 : vector<1x32xf32> to vector<8x32xf32>
    %119 = arith.addf %114, %118 : vector<8x32xf32>
    %120 = arith.addf %6, %119 : vector<8x32xf32>
    %c0_69 = arith.constant 0 : index
    %c0_70 = arith.constant 0 : index
    %121 = vector.load %arg13[%c0_69, %c0_70] : memref<1x32xf32, #tpu.memory_space<vmem>>, vector<1x32xf32>
    %122 = vector.shape_cast %121 : vector<1x32xf32> to vector<32xf32>
    %c0_71 = arith.constant 0 : index
    %c0_72 = arith.constant 0 : index
    %123 = vector.load %arg14[%c0_71, %c0_72] : memref<1x32xf32, #tpu.memory_space<vmem>>, vector<1x32xf32>
    %124 = vector.shape_cast %123 : vector<1x32xf32> to vector<32xf32>
    %cst_73 = arith.constant dense<0.000000e+00> : vector<8xf32>
    %125 = vector.multi_reduction <add>, %120, %cst_73 [1] : vector<8x32xf32> to vector<8xf32>
    %126 = vector.shape_cast %125 : vector<8xf32> to vector<8x1xf32>
    %cst_74 = arith.constant 3.200000e+01 : f32
    %127 = vector.broadcast %cst_74 : f32 to vector<8x1xf32>
    %128 = arith.divf %126, %127 : vector<8x1xf32>
    %129 = vector.broadcast %128 : vector<8x1xf32> to vector<8x32xf32>
    %130 = arith.subf %120, %129 : vector<8x32xf32>
    %131 = arith.mulf %130, %130 : vector<8x32xf32>
    %cst_75 = arith.constant dense<0.000000e+00> : vector<8xf32>
    %132 = vector.multi_reduction <add>, %131, %cst_75 [1] : vector<8x32xf32> to vector<8xf32>
    %133 = vector.shape_cast %132 : vector<8xf32> to vector<8x1xf32>
    %cst_76 = arith.constant 3.200000e+01 : f32
    %134 = vector.broadcast %cst_76 : f32 to vector<8x1xf32>
    %135 = arith.divf %133, %134 : vector<8x1xf32>
    %136 = vector.broadcast %128 : vector<8x1xf32> to vector<8x32xf32>
    %137 = arith.subf %120, %136 : vector<8x32xf32>
    %cst_77 = arith.constant 9.99999974E-6 : f32
    %138 = vector.broadcast %cst_77 : f32 to vector<8x1xf32>
    %139 = arith.addf %135, %138 : vector<8x1xf32>
    %140 = math.rsqrt %139 : vector<8x1xf32>
    %141 = vector.broadcast %140 : vector<8x1xf32> to vector<8x32xf32>
    %142 = arith.mulf %137, %141 : vector<8x32xf32>
    %143 = vector.shape_cast %122 : vector<32xf32> to vector<1x32xf32>
    %144 = vector.broadcast %143 : vector<1x32xf32> to vector<8x32xf32>
    %145 = arith.mulf %142, %144 : vector<8x32xf32>
    %146 = vector.shape_cast %124 : vector<32xf32> to vector<1x32xf32>
    %147 = vector.broadcast %146 : vector<1x32xf32> to vector<8x32xf32>
    %148 = arith.addf %145, %147 : vector<8x32xf32>
    %149 = arith.truncf %148 : vector<8x32xf32> to vector<8x32xbf16>
    %c0_78 = arith.constant 0 : index
    %c0_79 = arith.constant 0 : index
    %150 = vector.load %arg15[%c0_78, %c0_79] : memref<32x64xbf16, #tpu.memory_space<vmem>>, vector<32x64xbf16>
    %cst_80 = arith.constant dense<0.000000e+00> : vector<8x64xf32>
    %151 = tpu.matmul %149, %150, %cst_80 {dimension_numbers = #tpu.dot_dimension_numbers<[1], [0], [0], [1], [0, 0, 1, 1], [], []>} : vector<8x32xbf16>, vector<32x64xbf16>, vector<8x64xf32> -> vector<8x64xf32>
    %c0_81 = arith.constant 0 : index
    %c0_82 = arith.constant 0 : index
    %152 = vector.load %arg16[%c0_81, %c0_82] : memref<1x64xf32, #tpu.memory_space<vmem>>, vector<1x64xf32>
    %153 = vector.shape_cast %152 : vector<1x64xf32> to vector<64xf32>
    %154 = vector.shape_cast %153 : vector<64xf32> to vector<1x64xf32>
    %155 = vector.broadcast %154 : vector<1x64xf32> to vector<8x64xf32>
    %156 = arith.addf %151, %155 : vector<8x64xf32>
    %cst_83 = arith.constant 5.000000e-01 : f32
    %157 = vector.broadcast %cst_83 : f32 to vector<8x64xf32>
    %158 = arith.mulf %157, %156 : vector<8x64xf32>
    %cst_84 = arith.constant 0.707106769 : f32
    %159 = vector.broadcast %cst_84 : f32 to vector<8x64xf32>
    %160 = arith.mulf %156, %159 : vector<8x64xf32>
    %cst_85 = arith.constant 0.000000e+00 : f32
    %161 = vector.broadcast %cst_85 : f32 to vector<8x64xf32>
    %162 = arith.cmpf oge, %160, %161 : vector<8x64xf32>
    %cst_86 = arith.constant 1.000000e+00 : f32
    %cst_87 = arith.constant -1.000000e+00 : f32
    %163 = vector.broadcast %cst_86 : f32 to vector<8x64xf32>
    %164 = vector.broadcast %cst_87 : f32 to vector<8x64xf32>
    %165 = arith.select %162, %163, %164 : vector<8x64xi1>, vector<8x64xf32>
    %166 = math.absf %160 : vector<8x64xf32>
    %cst_88 = arith.constant 0.327591091 : f32
    %167 = vector.broadcast %cst_88 : f32 to vector<8x64xf32>
    %168 = arith.mulf %167, %166 : vector<8x64xf32>
    %cst_89 = arith.constant 1.000000e+00 : f32
    %169 = vector.broadcast %cst_89 : f32 to vector<8x64xf32>
    %170 = arith.addf %169, %168 : vector<8x64xf32>
    %cst_90 = arith.constant 1.000000e+00 : f32
    %171 = vector.broadcast %cst_90 : f32 to vector<8x64xf32>
    %172 = arith.divf %171, %170 : vector<8x64xf32>
    %cst_91 = arith.constant 1.06140542 : f32
    %173 = vector.broadcast %cst_91 : f32 to vector<8x64xf32>
    %174 = arith.mulf %173, %172 : vector<8x64xf32>
    %cst_92 = arith.constant -1.45315206 : f32
    %175 = vector.broadcast %cst_92 : f32 to vector<8x64xf32>
    %176 = arith.addf %174, %175 : vector<8x64xf32>
    %177 = arith.mulf %176, %172 : vector<8x64xf32>
    %cst_93 = arith.constant 1.42141378 : f32
    %178 = vector.broadcast %cst_93 : f32 to vector<8x64xf32>
    %179 = arith.addf %177, %178 : vector<8x64xf32>
    %180 = arith.mulf %179, %172 : vector<8x64xf32>
    %cst_94 = arith.constant -0.284496725 : f32
    %181 = vector.broadcast %cst_94 : f32 to vector<8x64xf32>
    %182 = arith.addf %180, %181 : vector<8x64xf32>
    %183 = arith.mulf %182, %172 : vector<8x64xf32>
    %cst_95 = arith.constant 0.254829586 : f32
    %184 = vector.broadcast %cst_95 : f32 to vector<8x64xf32>
    %185 = arith.addf %183, %184 : vector<8x64xf32>
    %186 = arith.mulf %185, %172 : vector<8x64xf32>
    %cst_96 = arith.constant 0.000000e+00 : f32
    %187 = vector.broadcast %cst_96 : f32 to vector<8x64xf32>
    %188 = arith.subf %187, %166 : vector<8x64xf32>
    %189 = arith.mulf %188, %166 : vector<8x64xf32>
    %190 = math.exp %189 : vector<8x64xf32>
    %191 = arith.mulf %186, %190 : vector<8x64xf32>
    %cst_97 = arith.constant 1.000000e+00 : f32
    %192 = vector.broadcast %cst_97 : f32 to vector<8x64xf32>
    %193 = arith.subf %192, %191 : vector<8x64xf32>
    %194 = arith.mulf %165, %193 : vector<8x64xf32>
    %cst_98 = arith.constant 1.000000e+00 : f32
    %195 = vector.broadcast %cst_98 : f32 to vector<8x64xf32>
    %196 = arith.addf %195, %194 : vector<8x64xf32>
    %197 = arith.mulf %158, %196 : vector<8x64xf32>
    %198 = arith.truncf %197 : vector<8x64xf32> to vector<8x64xbf16>
    %c0_99 = arith.constant 0 : index
    %c0_100 = arith.constant 0 : index
    %199 = vector.load %arg17[%c0_99, %c0_100] : memref<64x32xbf16, #tpu.memory_space<vmem>>, vector<64x32xbf16>
    %cst_101 = arith.constant dense<0.000000e+00> : vector<8x32xf32>
    %200 = tpu.matmul %198, %199, %cst_101 {dimension_numbers = #tpu.dot_dimension_numbers<[1], [0], [0], [1], [0, 0, 1, 1], [], []>} : vector<8x64xbf16>, vector<64x32xbf16>, vector<8x32xf32> -> vector<8x32xf32>
    %c0_102 = arith.constant 0 : index
    %c0_103 = arith.constant 0 : index
    %201 = vector.load %arg18[%c0_102, %c0_103] : memref<1x32xf32, #tpu.memory_space<vmem>>, vector<1x32xf32>
    %202 = vector.shape_cast %201 : vector<1x32xf32> to vector<32xf32>
    %203 = vector.shape_cast %202 : vector<32xf32> to vector<1x32xf32>
    %204 = vector.broadcast %203 : vector<1x32xf32> to vector<8x32xf32>
    %205 = arith.addf %200, %204 : vector<8x32xf32>
    %206 = arith.addf %120, %205 : vector<8x32xf32>
    %c0_104 = arith.constant 0 : index
    %c0_105 = arith.constant 0 : index
    %c0_106 = arith.constant 0 : index
    %207 = vector.load %arg19[%c0_104, %c0_105, %c0_106] : memref<1x8x32xf32, #tpu.memory_space<vmem>>, vector<1x8x32xf32>
    %208 = vector.shape_cast %207 : vector<1x8x32xf32> to vector<8x32xf32>
    %209 = vector.shape_cast %206 : vector<8x32xf32> to vector<1x8x32xf32>
    tpu.vector_store %arg19[%c0_104, %c0_105, %c0_106], %209 {strides = array<i32>} : memref<1x8x32xf32, #tpu.memory_space<vmem>>, vector<1x8x32xf32>,
    %cst_107 = arith.constant 2.500000e-01 : f32
    %210 = vector.broadcast %cst_107 : f32 to vector<8x8xf32>
    %211 = arith.mulf %102, %210 : vector<8x8xf32>
    %c0_108 = arith.constant 0 : index
    %c0_109 = arith.constant 0 : index
    %c0_110 = arith.constant 0 : index
    %212 = vector.load %arg20[%c0_108, %c0_109, %c0_110] : memref<1x8x8xf32, #tpu.memory_space<vmem>>, vector<1x8x8xf32>
    %213 = vector.shape_cast %212 : vector<1x8x8xf32> to vector<8x8xf32>
    %214 = vector.shape_cast %211 : vector<8x8xf32> to vector<1x8x8xf32>
    tpu.vector_store %arg20[%c0_108, %c0_109, %c0_110], %214 {strides = array<i32>} : memref<1x8x8xf32, #tpu.memory_space<vmem>>, vector<1x8x8xf32>,
    return
  }
  func.func @transform_0(%arg0: i32, %arg1: i32) -> (i32, i32, i32) {
    %c0_i32 = arith.constant 0 : i32
    %c0_i32_0 = arith.constant 0 : i32
    %c0_i32_1 = arith.constant 0 : i32
    return %arg0, %c0_i32, %c0_i32_0 : i32, i32, i32
  }
  func.func @transform_1(%arg0: i32, %arg1: i32) -> (i32, i32) {
    %c0_i32 = arith.constant 0 : i32
    %c0_i32_0 = arith.constant 0 : i32
    %c0_i32_1 = arith.constant 0 : i32
    return %c0_i32, %c0_i32_0 : i32, i32
  }
  func.func @transform_2(%arg0: i32, %arg1: i32) -> (i32, i32) {
    %c0_i32 = arith.constant 0 : i32
    %c0_i32_0 = arith.constant 0 : i32
    %c0_i32_1 = arith.constant 0 : i32
    return %c0_i32, %c0_i32_0 : i32, i32
  }
  func.func @transform_3(%arg0: i32, %arg1: i32) -> (i32, i32) {
    %c0_i32 = arith.constant 0 : i32
    %c0_i32_0 = arith.constant 0 : i32
    %c0_i32_1 = arith.constant 0 : i32
    return %c0_i32, %c0_i32_0 : i32, i32
  }
  func.func @transform_4(%arg0: i32, %arg1: i32) -> (i32, i32) {
    %c0_i32 = arith.constant 0 : i32
    %c0_i32_0 = arith.constant 0 : i32
    %c0_i32_1 = arith.constant 0 : i32
    return %c0_i32, %c0_i32_0 : i32, i32
  }
  func.func @transform_5(%arg0: i32, %arg1: i32) -> (i32, i32) {
    %c0_i32 = arith.constant 0 : i32
    %c0_i32_0 = arith.constant 0 : i32
    %c0_i32_1 = arith.constant 0 : i32
    return %c0_i32, %c0_i32_0 : i32, i32
  }
  func.func @transform_6(%arg0: i32, %arg1: i32) -> (i32, i32) {
    %c0_i32 = arith.constant 0 : i32
    %c0_i32_0 = arith.constant 0 : i32
    %c0_i32_1 = arith.constant 0 : i32
    return %c0_i32, %c0_i32_0 : i32, i32
  }
  func.func @transform_7(%arg0: i32, %arg1: i32) -> (i32, i32) {
    %c0_i32 = arith.constant 0 : i32
    %c0_i32_0 = arith.constant 0 : i32
    %c0_i32_1 = arith.constant 0 : i32
    return %c0_i32, %c0_i32_0 : i32, i32
  }
  func.func @transform_8(%arg0: i32, %arg1: i32) -> (i32, i32) {
    %c0_i32 = arith.constant 0 : i32
    %c0_i32_0 = arith.constant 0 : i32
    %c0_i32_1 = arith.constant 0 : i32
    return %c0_i32, %c0_i32_0 : i32, i32
  }
  func.func @transform_9(%arg0: i32, %arg1: i32) -> (i32, i32) {
    %c0_i32 = arith.constant 0 : i32
    %c0_i32_0 = arith.constant 0 : i32
    %c0_i32_1 = arith.constant 0 : i32
    return %c0_i32, %c0_i32_0 : i32, i32
  }
  func.func @transform_10(%arg0: i32, %arg1: i32) -> (i32, i32) {
    %c0_i32 = arith.constant 0 : i32
    %c0_i32_0 = arith.constant 0 : i32
    %c0_i32_1 = arith.constant 0 : i32
    return %c0_i32, %c0_i32_0 : i32, i32
  }
  func.func @transform_11(%arg0: i32, %arg1: i32) -> (i32, i32) {
    %c0_i32 = arith.constant 0 : i32
    %c0_i32_0 = arith.constant 0 : i32
    %c0_i32_1 = arith.constant 0 : i32
    return %c0_i32, %c0_i32_0 : i32, i32
  }
  func.func @transform_12(%arg0: i32, %arg1: i32) -> (i32, i32) {
    %c0_i32 = arith.constant 0 : i32
    %c0_i32_0 = arith.constant 0 : i32
    %c0_i32_1 = arith.constant 0 : i32
    return %c0_i32, %c0_i32_0 : i32, i32
  }
  func.func @transform_13(%arg0: i32, %arg1: i32) -> (i32, i32) {
    %c0_i32 = arith.constant 0 : i32
    %c0_i32_0 = arith.constant 0 : i32
    %c0_i32_1 = arith.constant 0 : i32
    return %c0_i32, %c0_i32_0 : i32, i32
  }
  func.func @transform_14(%arg0: i32, %arg1: i32) -> (i32, i32) {
    %c0_i32 = arith.constant 0 : i32
    %c0_i32_0 = arith.constant 0 : i32
    %c0_i32_1 = arith.constant 0 : i32
    return %c0_i32, %c0_i32_0 : i32, i32
  }
  func.func @transform_15(%arg0: i32, %arg1: i32) -> (i32, i32) {
    %c0_i32 = arith.constant 0 : i32
    %c0_i32_0 = arith.constant 0 : i32
    %c0_i32_1 = arith.constant 0 : i32
    return %c0_i32, %c0_i32_0 : i32, i32
  }
  func.func @transform_16(%arg0: i32, %arg1: i32) -> (i32, i32) {
    %c0_i32 = arith.constant 0 : i32
    %c0_i32_0 = arith.constant 0 : i32
    %c0_i32_1 = arith.constant 0 : i32
    return %c0_i32, %c0_i32_0 : i32, i32
  }
  func.func @transform_17(%arg0: i32, %arg1: i32) -> (i32, i32, i32) {
    %c0_i32 = arith.constant 0 : i32
    %c0_i32_0 = arith.constant 0 : i32
    return %arg0, %arg1, %c0_i32 : i32, i32, i32
  }
  func.func @transform_18(%arg0: i32, %arg1: i32) -> (i32, i32, i32) {
    %c0_i32 = arith.constant 0 : i32
    %c0_i32_0 = arith.constant 0 : i32
    return %arg0, %arg1, %c0_i32 : i32, i32, i32
  }
}

</mosaic_0001>

<llo_original>
// kernel: tpu_custom_call.1
$region0: #{tpu_custom_call.1}
  #allocation0 [shape = 'u32[]', space=smem, size = 0x4, offset = 0x4, fixed_abs, tag = 'smem constant byte address 0x4 - core index']
  #allocation1 [shape = 'u32[144,128]{1,0:T(1,128)}', space=vmem, size = 0x12000, scoped, tag = 'internal scratch']
  #allocation2 [shape = 'f32[8,32]{1,0:T(8,128)}', space=vmem, size = 0x1000, scoped, tag = 'scratch operand']
  #allocation3 [shape = 'bf16[8,32]{1,0:T(8,128)(2,1)}', space=vmem, size = 0x800, scoped, tag = 'scratch operand']
  #allocation4 [shape = 'bf16[32,8]{1,0:T(16,128)(2,1)}', space=vmem, size = 0x2000, scoped, tag = 'scratch operand']
  #allocation5 [shape = 'bf16[8,32]{1,0:T(8,128)(2,1)}', space=vmem, size = 0x800, scoped, tag = 'scratch operand']
  #allocation6 [shape = 'f32[8,8]{1,0:T(8,128)}', space=vmem, size = 0x1000, scoped, tag = 'scratch operand']
  #allocation7 [shape = 'bf16[8,32]{1,0:T(8,128)(2,1)}', space=vmem, size = 0x800, scoped, tag = 'scratch operand']
  #allocation8 [shape = 'f32[8,8]{1,0:T(8,128)}', space=vmem, size = 0x1000, scoped, tag = 'scratch operand']
  %s0 = inlined_call_operand.hbm [shape: bf16[2,8,32], index: 0, kind: input, shape index: {}]
  %s1 = inlined_call_operand.vmem [shape: bf16[32,32], index: 1, kind: input, shape index: {}]
  %s2 = inlined_call_operand.vmem [shape: bf16[32,32], index: 2, kind: input, shape index: {}]
  %s3 = inlined_call_operand.vmem [shape: bf16[32,32], index: 3, kind: input, shape index: {}]
  %s4 = inlined_call_operand.vmem [shape: f32[1,32], index: 4, kind: input, shape index: {}]
  %s5 = inlined_call_operand.vmem [shape: f32[1,32], index: 5, kind: input, shape index: {}]
  %s6 = inlined_call_operand.hbm [shape: f32[1,32], index: 6, kind: input, shape index: {}]
  %s7 = inlined_call_operand.hbm [shape: bf16[32,32], index: 7, kind: input, shape index: {}]
  %s8 = inlined_call_operand.hbm [shape: f32[1,32], index: 8, kind: input, shape index: {}]
  %s9 = inlined_call_operand.hbm [shape: f32[1,32], index: 9, kind: input, shape index: {}]
  %s10 = inlined_call_operand.vmem [shape: f32[1,32], index: 10, kind: input, shape index: {}]
  %s11 = inlined_call_operand.vmem [shape: f32[1,32], index: 11, kind: input, shape index: {}]
  %s12 = inlined_call_operand.vmem [shape: f32[1,32], index: 12, kind: input, shape index: {}]
  %s13 = inlined_call_operand.vmem [shape: bf16[32,64], index: 13, kind: input, shape index: {}]
  %s14 = inlined_call_operand.vmem [shape: f32[1,64], index: 14, kind: input, shape index: {}]
  %s15 = inlined_call_operand.vmem [shape: bf16[64,32], index: 15, kind: input, shape index: {}]
  %s16 = inlined_call_operand.vmem [shape: f32[1,32], index: 16, kind: input, shape index: {}]
  %s17 = inlined_call_operand.hbm [shape: f32[2,8,32], index: 17, kind: output, shape index: {0}]
  %s18 = inlined_call_operand.hbm [shape: f32[2,8,8], index: 18, kind: output, shape index: {1}]
  %19 = xla_tuple %s17, %s18
  %s20 = sld [smem:[#allocation0]]
  $region165: #{tpu_custom_call.1} parent=0
    _
  %s22 = ssub.s32 1, %s20
  %s23 = scalar_select 0, %s22, %s20
  $region1: #{tpu_custom_call.1} parent=0
    #allocation9 [shape = 'u8[4096]{0}', space=vmem, size = 0x1000, scoped, tag = 'input window, operand 0']
    #allocation10 [shape = 's32[2]{0}', space=sflag, size = 0x8, scoped, tag = 'scoped memory for tpu_custom_call.1']
    #allocation11 [shape = 's32[2]{0}', space=sflag, size = 0x8, scoped, tag = 'scoped memory for tpu_custom_call.1']
    #allocation12 [shape = 'u8[512]{0}', space=vmem, size = 0x400, scoped, tag = 'input window, operand 6, single buffered']
    #allocation13 [shape = 's32[1]{0}', space=sflag, size = 0x4, scoped, tag = 'scoped memory for tpu_custom_call.1']
    #allocation14 [shape = 'u8[8192]{0}', space=vmem, size = 0x2000, scoped, tag = 'input window, operand 7, single buffered']
    #allocation15 [shape = 'u8[512]{0}', space=vmem, size = 0x400, scoped, tag = 'input window, operand 8, single buffered']
    #allocation16 [shape = 's32[1]{0}', space=sflag, size = 0x4, scoped, tag = 'scoped memory for tpu_custom_call.1']
    #allocation17 [shape = 'u8[512]{0}', space=vmem, size = 0x400, scoped, tag = 'input window, operand 9, single buffered']
    #allocation18 [shape = 'u8[8192]{0}', space=vmem, size = 0x2000, scoped, tag = 'output window, operand 0']
    #allocation19 [shape = 'u8[8192]{0}', space=vmem, size = 0x2000, scoped, tag = 'output window, operand 1']
    #allocation20 [shape = 's32[2]{0}', space=sflag, size = 0x8, scoped, tag = 'scoped memory for tpu_custom_call.1']
    %24 = vsyncpa [#allocation10], 0
    %s25 = scalar_lea.sflag [#allocation10], 1
    %26 = vsyncpa %s25, 0
    %27 = vsyncpa [#allocation13], 0
    %28 = vsyncpa [#allocation16], 0
    %29 = vsyncpa [#allocation11], 0
    %s30 = scalar_lea.sflag [#allocation11], 1
    %31 = vsyncpa %s30, 0
    %32 = vsyncpa [#allocation20], 0
    %s33 = scalar_lea.sflag [#allocation20], 1
    %34 = vsyncpa %s33, 0
    loop: start=0, step=1, limit=4
    $region2: #{tpu_custom_call.1} parent=1 // loop_pre_header
      _
    $region3: #{tpu_custom_call.1} parent=1 // loop_header
      %s36 = sphi 0, %s40
      %p37 = scmp.ge.s32.totalorder %s36, 4
      %s43 = sphi 0, %s55
      %s44 = sphi 0, %s51
      %s45 = sphi 0, %s43
      %s46 = sphi 0, %s44
      %s47 = sphi 0, %s45
      %s48 = sphi 0, %s46
      %s58 = sphi 0, %s60
      %s61 = sphi 0, %s58
      %s62 = sphi 0, %s61
      %s78 = sphi 0, %s62
      %s82 = sphi 0, %s82
      %s84 = sphi 0, %s82
      %s85 = sphi 0, %s84
      %s99 = sphi 0, %s85
      %s103 = sphi 0, %s103
      %s105 = sphi 0, %s103
      %s106 = sphi 0, %s105
      %s120 = sphi 0, %s106
      %s124 = sphi 0, %s124
      %s126 = sphi 0, %s124
      %s127 = sphi 0, %s126
      %s141 = sphi 0, %s127
      %s145 = sphi 0, %s145
      %s147 = sphi 0, %s145
      %s148 = sphi 0, %s147
      %s162 = sphi 0, %s148
      %s166 = sphi 0, %s166
      %s168 = sphi 0, %s166
      %s169 = sphi 0, %s168
      %s183 = sphi 0, %s169
      %s187 = sphi 0, %s187
      %s189 = sphi 0, %s187
      %s190 = sphi 0, %s189
      %s204 = sphi 0, %s190
      %s208 = sphi 0, %s208
      %s210 = sphi 0, %s208
      %s211 = sphi 0, %s210
      %s225 = sphi 0, %s211
      %s229 = sphi 0, %s229
      %s231 = sphi 0, %s229
      %s232 = sphi 0, %s231
      %s246 = sphi 0, %s232
      %s250 = sphi 0, %s250
      %s252 = sphi 0, %s250
      %s253 = sphi 0, %s252
      %s267 = sphi 0, %s253
      %s271 = sphi 0, %s271
      %s273 = sphi 0, %s271
      %s274 = sphi 0, %s273
      %s288 = sphi 0, %s274
      %s292 = sphi 0, %s292
      %s294 = sphi 0, %s292
      %s295 = sphi 0, %s294
      %s309 = sphi 0, %s295
      %s313 = sphi 0, %s313
      %s315 = sphi 0, %s313
      %s316 = sphi 0, %s315
      %s330 = sphi 0, %s316
      %s334 = sphi 0, %s334
      %s336 = sphi 0, %s334
      %s337 = sphi 0, %s336
      %s351 = sphi 0, %s337
      %s355 = sphi 0, %s355
      %s357 = sphi 0, %s355
      %s358 = sphi 0, %s357
      %s372 = sphi 0, %s358
      %s376 = sphi 0, %s376
      %s378 = sphi 0, %s376
      %s379 = sphi 0, %s378
      %s393 = sphi 0, %s379
      %s397 = sphi 0, %s397
      %s399 = sphi 0, %s397
      %s400 = sphi 0, %s399
      %s414 = sphi 0, %s400
      %s422 = sphi 0, %s424
      %s425 = sphi 0, %s422
      %s426 = sphi 0, %s425
      %s442 = sphi 0, %s426
      %s450 = sphi 0, %s452
      %s453 = sphi 0, %s450
      %s454 = sphi 0, %s453
      %s470 = sphi 0, %s454
    $region4: #{tpu_custom_call.1} parent=1 // loop_header_branch
      %39 = sbr.rel (%p37) target = $region8
    $region5: #{tpu_custom_call.1} parent=1 // loop_body
      %s41 = ssub.s32 %s36, 1
      %s42 = ssub.s32 %s36, 2
      %s49 = sadd.s32 1, %s44
      %p50 = scmp.ge.s32.totalorder %s49, 1
      %s51 = scalar_select %p50, 0, %s49
      %s52 = sadd.s32 1, %s43
      %s53 = scalar_select %p50, %s52, %s43
      %p54 = scmp.ge.s32.totalorder %s53, 2
      %s55 = scalar_select %p54, 0, %s53
      %s56 = ssub.s32 %s43, %s55
      %p57 = scmp.eq.s32.totalorder %s56, 0
      %s59 = sadd.s32 %s58, 1
      %s60 = scalar_select %p57, %s58, %s59
      %p63 = pneg %p57
      %p64 = scmp.eq.s32.totalorder %s36, 1
      %p65 = por %p63, %p64
      %p66 = scmp.ne.s32.totalorder %s58, %s61
      %p67 = scmp.eq.s32.totalorder %s36, 0
      %p68 = por %p66, %p67
      %p69 = scmp.ne.s32.totalorder %s58, %s61
      %p70 = scmp.eq.s32.totalorder %s41, 1
      %p71 = por %p69, %p70
      %p72 = scmp.ne.s32.totalorder %s61, %s62
      %p73 = scmp.eq.s32.totalorder %s41, 0
      %p74 = por %p72, %p73
      %p75 = scmp.ne.s32.totalorder %s61, %s62
      %p76 = scmp.eq.s32.totalorder %s42, 1
      %p77 = por %p75, %p76
      %p79 = scmp.ne.s32.totalorder %s62, %s78
      %p80 = scmp.eq.s32.totalorder %s42, 0
      %p81 = por %p79, %p80
      %s83 = sadd.s32 %s82, 1
      %p86 = scmp.eq.s32.totalorder %s36, 1
      %p87 = scmp.ne.s32.totalorder %s82, %s84
      %p88 = scmp.eq.s32.totalorder %s36, 0
      %p89 = por %p87, %p88
      %p90 = scmp.ne.s32.totalorder %s82, %s84
      %p91 = scmp.eq.s32.totalorder %s41, 1
      %p92 = por %p90, %p91
      %p93 = scmp.ne.s32.totalorder %s84, %s85
      %p94 = scmp.eq.s32.totalorder %s41, 0
      %p95 = por %p93, %p94
      %p96 = scmp.ne.s32.totalorder %s84, %s85
      %p97 = scmp.eq.s32.totalorder %s42, 1
      %p98 = por %p96, %p97
      %p100 = scmp.ne.s32.totalorder %s85, %s99
      %p101 = scmp.eq.s32.totalorder %s42, 0
      %p102 = por %p100, %p101
      %s104 = sadd.s32 %s103, 1
      %p107 = scmp.eq.s32.totalorder %s36, 1
      %p108 = scmp.ne.s32.totalorder %s103, %s105
      %p109 = scmp.eq.s32.totalorder %s36, 0
      %p110 = por %p108, %p109
      %p111 = scmp.ne.s32.totalorder %s103, %s105
      %p112 = scmp.eq.s32.totalorder %s41, 1
      %p113 = por %p111, %p112
      %p114 = scmp.ne.s32.totalorder %s105, %s106
      %p115 = scmp.eq.s32.totalorder %s41, 0
      %p116 = por %p114, %p115
      %p117 = scmp.ne.s32.totalorder %s105, %s106
      %p118 = scmp.eq.s32.totalorder %s42, 1
      %p119 = por %p117, %p118
      %p121 = scmp.ne.s32.totalorder %s106, %s120
      %p122 = scmp.eq.s32.totalorder %s42, 0
      %p123 = por %p121, %p122
      %s125 = sadd.s32 %s124, 1
      %p128 = scmp.eq.s32.totalorder %s36, 1
      %p129 = scmp.ne.s32.totalorder %s124, %s126
      %p130 = scmp.eq.s32.totalorder %s36, 0
      %p131 = por %p129, %p130
      %p132 = scmp.ne.s32.totalorder %s124, %s126
      %p133 = scmp.eq.s32.totalorder %s41, 1
      %p134 = por %p132, %p133
      %p135 = scmp.ne.s32.totalorder %s126, %s127
      %p136 = scmp.eq.s32.totalorder %s41, 0
      %p137 = por %p135, %p136
      %p138 = scmp.ne.s32.totalorder %s126, %s127
      %p139 = scmp.eq.s32.totalorder %s42, 1
      %p140 = por %p138, %p139
      %p142 = scmp.ne.s32.totalorder %s127, %s141
      %p143 = scmp.eq.s32.totalorder %s42, 0
      %p144 = por %p142, %p143
      %s146 = sadd.s32 %s145, 1
      %p149 = scmp.eq.s32.totalorder %s36, 1
      %p150 = scmp.ne.s32.totalorder %s145, %s147
      %p151 = scmp.eq.s32.totalorder %s36, 0
      %p152 = por %p150, %p151
      %p153 = scmp.ne.s32.totalorder %s145, %s147
      %p154 = scmp.eq.s32.totalorder %s41, 1
      %p155 = por %p153, %p154
      %p156 = scmp.ne.s32.totalorder %s147, %s148
      %p157 = scmp.eq.s32.totalorder %s41, 0
      %p158 = por %p156, %p157
      %p159 = scmp.ne.s32.totalorder %s147, %s148
      %p160 = scmp.eq.s32.totalorder %s42, 1
      %p161 = por %p159, %p160
      %p163 = scmp.ne.s32.totalorder %s148, %s162
      %p164 = scmp.eq.s32.totalorder %s42, 0
      %p165 = por %p163, %p164
      %s167 = sadd.s32 %s166, 1
      %p170 = scmp.eq.s32.totalorder %s36, 1
      %p171 = scmp.ne.s32.totalorder %s166, %s168
      %p172 = scmp.eq.s32.totalorder %s36, 0
      %p173 = por %p171, %p172
      %p174 = scmp.ne.s32.totalorder %s166, %s168
      %p175 = scmp.eq.s32.totalorder %s41, 1
      %p176 = por %p174, %p175
      %p177 = scmp.ne.s32.totalorder %s168, %s169
      %p178 = scmp.eq.s32.totalorder %s41, 0
      %p179 = por %p177, %p178
      %p180 = scmp.ne.s32.totalorder %s168, %s169
      %p181 = scmp.eq.s32.totalorder %s42, 1
      %p182 = por %p180, %p181
      %p184 = scmp.ne.s32.totalorder %s169, %s183
      %p185 = scmp.eq.s32.totalorder %s42, 0
      %p186 = por %p184, %p185
      %s188 = sadd.s32 %s187, 1
      %p191 = scmp.eq.s32.totalorder %s36, 1
      %p192 = scmp.ne.s32.totalorder %s187, %s189
      %p193 = scmp.eq.s32.totalorder %s36, 0
      %p194 = por %p192, %p193
      %p195 = scmp.ne.s32.totalorder %s187, %s189
      %p196 = scmp.eq.s32.totalorder %s41, 1
      %p197 = por %p195, %p196
      %p198 = scmp.ne.s32.totalorder %s189, %s190
      %p199 = scmp.eq.s32.totalorder %s41, 0
      %p200 = por %p198, %p199
      %p201 = scmp.ne.s32.totalorder %s189, %s190
      %p202 = scmp.eq.s32.totalorder %s42, 1
      %p203 = por %p201, %p202
      %p205 = scmp.ne.s32.totalorder %s190, %s204
      %p206 = scmp.eq.s32.totalorder %s42, 0
      %p207 = por %p205, %p206
      %s209 = sadd.s32 %s208, 1
      %p212 = scmp.eq.s32.totalorder %s36, 1
      %p213 = scmp.ne.s32.totalorder %s208, %s210
      %p214 = scmp.eq.s32.totalorder %s36, 0
      %p215 = por %p213, %p214
      %p216 = scmp.ne.s32.totalorder %s208, %s210
      %p217 = scmp.eq.s32.totalorder %s41, 1
      %p218 = por %p216, %p217
      %p219 = scmp.ne.s32.totalorder %s210, %s211
      %p220 = scmp.eq.s32.totalorder %s41, 0
      %p221 = por %p219, %p220
      %p222 = scmp.ne.s32.totalorder %s210, %s211
      %p223 = scmp.eq.s32.totalorder %s42, 1
      %p224 = por %p222, %p223
      %p226 = scmp.ne.s32.totalorder %s211, %s225
      %p227 = scmp.eq.s32.totalorder %s42, 0
      %p228 = por %p226, %p227
      %s230 = sadd.s32 %s229, 1
      %p233 = scmp.eq.s32.totalorder %s36, 1
      %p234 = scmp.ne.s32.totalorder %s229, %s231
      %p235 = scmp.eq.s32.totalorder %s36, 0
      %p236 = por %p234, %p235
      %p237 = scmp.ne.s32.totalorder %s229, %s231
      %p238 = scmp.eq.s32.totalorder %s41, 1
      %p239 = por %p237, %p238
      %p240 = scmp.ne.s32.totalorder %s231, %s232
      %p241 = scmp.eq.s32.totalorder %s41, 0
      %p242 = por %p240, %p241
      %p243 = scmp.ne.s32.totalorder %s231, %s232
      %p244 = scmp.eq.s32.totalorder %s42, 1
      %p245 = por %p243, %p244
      %p247 = scmp.ne.s32.totalorder %s232, %s246
      %p248 = scmp.eq.s32.totalorder %s42, 0
      %p249 = por %p247, %p248
      %s251 = sadd.s32 %s250, 1
      %p254 = scmp.eq.s32.totalorder %s36, 1
      %p255 = scmp.ne.s32.totalorder %s250, %s252
      %p256 = scmp.eq.s32.totalorder %s36, 0
      %p257 = por %p255, %p256
      %p258 = scmp.ne.s32.totalorder %s250, %s252
      %p259 = scmp.eq.s32.totalorder %s41, 1
      %p260 = por %p258, %p259
      %p261 = scmp.ne.s32.totalorder %s252, %s253
      %p262 = scmp.eq.s32.totalorder %s41, 0
      %p263 = por %p261, %p262
      %p264 = scmp.ne.s32.totalorder %s252, %s253
      %p265 = scmp.eq.s32.totalorder %s42, 1
      %p266 = por %p264, %p265
      %p268 = scmp.ne.s32.totalorder %s253, %s267
      %p269 = scmp.eq.s32.totalorder %s42, 0
      %p270 = por %p268, %p269
      %s272 = sadd.s32 %s271, 1
      %p275 = scmp.eq.s32.totalorder %s36, 1
      %p276 = scmp.ne.s32.totalorder %s271, %s273
      %p277 = scmp.eq.s32.totalorder %s36, 0
      %p278 = por %p276, %p277
      %p279 = scmp.ne.s32.totalorder %s271, %s273
      %p280 = scmp.eq.s32.totalorder %s41, 1
      %p281 = por %p279, %p280
      %p282 = scmp.ne.s32.totalorder %s273, %s274
      %p283 = scmp.eq.s32.totalorder %s41, 0
      %p284 = por %p282, %p283
      %p285 = scmp.ne.s32.totalorder %s273, %s274
      %p286 = scmp.eq.s32.totalorder %s42, 1
      %p287 = por %p285, %p286
      %p289 = scmp.ne.s32.totalorder %s274, %s288
      %p290 = scmp.eq.s32.totalorder %s42, 0
      %p291 = por %p289, %p290
      %s293 = sadd.s32 %s292, 1
      %p296 = scmp.eq.s32.totalorder %s36, 1
      %p297 = scmp.ne.s32.totalorder %s292, %s294
      %p298 = scmp.eq.s32.totalorder %s36, 0
      %p299 = por %p297, %p298
      %p300 = scmp.ne.s32.totalorder %s292, %s294
      %p301 = scmp.eq.s32.totalorder %s41, 1
      %p302 = por %p300, %p301
      %p303 = scmp.ne.s32.totalorder %s294, %s295
      %p304 = scmp.eq.s32.totalorder %s41, 0
      %p305 = por %p303, %p304
      %p306 = scmp.ne.s32.totalorder %s294, %s295
      %p307 = scmp.eq.s32.totalorder %s42, 1
      %p308 = por %p306, %p307
      %p310 = scmp.ne.s32.totalorder %s295, %s309
      %p311 = scmp.eq.s32.totalorder %s42, 0
      %p312 = por %p310, %p311
      %s314 = sadd.s32 %s313, 1
      %p317 = scmp.eq.s32.totalorder %s36, 1
      %p318 = scmp.ne.s32.totalorder %s313, %s315
      %p319 = scmp.eq.s32.totalorder %s36, 0
      %p320 = por %p318, %p319
      %p321 = scmp.ne.s32.totalorder %s313, %s315
      %p322 = scmp.eq.s32.totalorder %s41, 1
      %p323 = por %p321, %p322
      %p324 = scmp.ne.s32.totalorder %s315, %s316
      %p325 = scmp.eq.s32.totalorder %s41, 0
      %p326 = por %p324, %p325
      %p327 = scmp.ne.s32.totalorder %s315, %s316
      %p328 = scmp.eq.s32.totalorder %s42, 1
      %p329 = por %p327, %p328
      %p331 = scmp.ne.s32.totalorder %s316, %s330
      %p332 = scmp.eq.s32.totalorder %s42, 0
      %p333 = por %p331, %p332
      %s335 = sadd.s32 %s334, 1
      %p338 = scmp.eq.s32.totalorder %s36, 1
      %p339 = scmp.ne.s32.totalorder %s334, %s336
      %p340 = scmp.eq.s32.totalorder %s36, 0
      %p341 = por %p339, %p340
      %p342 = scmp.ne.s32.totalorder %s334, %s336
      %p343 = scmp.eq.s32.totalorder %s41, 1
      %p344 = por %p342, %p343
      %p345 = scmp.ne.s32.totalorder %s336, %s337
      %p346 = scmp.eq.s32.totalorder %s41, 0
      %p347 = por %p345, %p346
      %p348 = scmp.ne.s32.totalorder %s336, %s337
      %p349 = scmp.eq.s32.totalorder %s42, 1
      %p350 = por %p348, %p349
      %p352 = scmp.ne.s32.totalorder %s337, %s351
      %p353 = scmp.eq.s32.totalorder %s42, 0
      %p354 = por %p352, %p353
      %s356 = sadd.s32 %s355, 1
      %p359 = scmp.eq.s32.totalorder %s36, 1
      %p360 = scmp.ne.s32.totalorder %s355, %s357
      %p361 = scmp.eq.s32.totalorder %s36, 0
      %p362 = por %p360, %p361
      %p363 = scmp.ne.s32.totalorder %s355, %s357
      %p364 = scmp.eq.s32.totalorder %s41, 1
      %p365 = por %p363, %p364
      %p366 = scmp.ne.s32.totalorder %s357, %s358
      %p367 = scmp.eq.s32.totalorder %s41, 0
      %p368 = por %p366, %p367
      %p369 = scmp.ne.s32.totalorder %s357, %s358
      %p370 = scmp.eq.s32.totalorder %s42, 1
      %p371 = por %p369, %p370
      %p373 = scmp.ne.s32.totalorder %s358, %s372
      %p374 = scmp.eq.s32.totalorder %s42, 0
      %p375 = por %p373, %p374
      %s377 = sadd.s32 %s376, 1
      %p380 = scmp.eq.s32.totalorder %s36, 1
      %p381 = scmp.ne.s32.totalorder %s376, %s378
      %p382 = scmp.eq.s32.totalorder %s36, 0
      %p383 = por %p381, %p382
      %p384 = scmp.ne.s32.totalorder %s376, %s378
      %p385 = scmp.eq.s32.totalorder %s41, 1
      %p386 = por %p384, %p385
      %p387 = scmp.ne.s32.totalorder %s378, %s379
      %p388 = scmp.eq.s32.totalorder %s41, 0
      %p389 = por %p387, %p388
      %p390 = scmp.ne.s32.totalorder %s378, %s379
      %p391 = scmp.eq.s32.totalorder %s42, 1
      %p392 = por %p390, %p391
      %p394 = scmp.ne.s32.totalorder %s379, %s393
      %p395 = scmp.eq.s32.totalorder %s42, 0
      %p396 = por %p394, %p395
      %s398 = sadd.s32 %s397, 1
      %p401 = scmp.eq.s32.totalorder %s36, 1
      %p402 = scmp.ne.s32.totalorder %s397, %s399
      %p403 = scmp.eq.s32.totalorder %s36, 0
      %p404 = por %p402, %p403
      %p405 = scmp.ne.s32.totalorder %s397, %s399
      %p406 = scmp.eq.s32.totalorder %s41, 1
      %p407 = por %p405, %p406
      %p408 = scmp.ne.s32.totalorder %s399, %s400
      %p409 = scmp.eq.s32.totalorder %s41, 0
      %p410 = por %p408, %p409
      %p411 = scmp.ne.s32.totalorder %s399, %s400
      %p412 = scmp.eq.s32.totalorder %s42, 1
      %p413 = por %p411, %p412
      %p415 = scmp.ne.s32.totalorder %s400, %s414
      %p416 = scmp.eq.s32.totalorder %s42, 0
      %p417 = por %p415, %p416
      %s418 = ssub.s32 %s43, %s55
      %s419 = ssub.s32 %s44, %s51
      %s420 = sor.u32 %s418, %s419
      %p421 = scmp.eq.s32.totalorder %s420, 0
      %s423 = sadd.s32 %s422, 1
      %s424 = scalar_select %p421, %s422, %s423
      %p427 = pneg %p421
      %p428 = scmp.eq.s32.totalorder %s36, 1
      %p429 = por %p427, %p428
      %p430 = scmp.ne.s32.totalorder %s422, %s425
      %p431 = scmp.eq.s32.totalorder %s36, 0
      %p432 = por %p430, %p431
      %p433 = scmp.ne.s32.totalorder %s422, %s425
      %p434 = scmp.eq.s32.totalorder %s41, 1
      %p435 = por %p433, %p434
      %p436 = scmp.ne.s32.totalorder %s425, %s426
      %p437 = scmp.eq.s32.totalorder %s41, 0
      %p438 = por %p436, %p437
      %p439 = scmp.ne.s32.totalorder %s425, %s426
      %p440 = scmp.eq.s32.totalorder %s42, 1
      %p441 = por %p439, %p440
      %p443 = scmp.ne.s32.totalorder %s426, %s442
      %p444 = scmp.eq.s32.totalorder %s42, 0
      %p445 = por %p443, %p444
      %s446 = ssub.s32 %s43, %s55
      %s447 = ssub.s32 %s44, %s51
      %s448 = sor.u32 %s446, %s447
      %p449 = scmp.eq.s32.totalorder %s448, 0
      %s451 = sadd.s32 %s450, 1
      %s452 = scalar_select %p449, %s450, %s451
      %p455 = pneg %p449
      %p456 = scmp.eq.s32.totalorder %s36, 1
      %p457 = por %p455, %p456
      %p458 = scmp.ne.s32.totalorder %s450, %s453
      %p459 = scmp.eq.s32.totalorder %s36, 0
      %p460 = por %p458, %p459
      %p461 = scmp.ne.s32.totalorder %s450, %s453
      %p462 = scmp.eq.s32.totalorder %s41, 1
      %p463 = por %p461, %p462
      %p464 = scmp.ne.s32.totalorder %s453, %s454
      %p465 = scmp.eq.s32.totalorder %s41, 0
      %p466 = por %p464, %p465
      %p467 = scmp.ne.s32.totalorder %s453, %s454
      %p468 = scmp.eq.s32.totalorder %s42, 1
      %p469 = por %p467, %p468
      %p471 = scmp.ne.s32.totalorder %s454, %s470
      %p472 = scmp.eq.s32.totalorder %s42, 0
      %p473 = por %p471, %p472
      %p474 = scmp.le.s32.totalorder 1, %s36
      %p475 = scmp.lt.s32.totalorder %s36, 3
      %p476 = pnand %p474, %p475
      %p477 = pneg %p476
      // Predicated region
      $region9: #{tpu_custom_call.1} parent=5 // pred_check
        _
      $region10: #{tpu_custom_call.1} parent=5 // pred_check_branch
        %479 = sbr.rel (%p476) target = $region12
      $region11: #{tpu_custom_call.1} parent=5 // pred_region
        %s480 = ssub.s32 %s36, 1
        // Predicated region
        $region13: #{tpu_custom_call.1} parent=11 // pred_check
          %p481 = pneg %p95
        $region14: #{tpu_custom_call.1} parent=11 // pred_check_branch
          %483 = sbr.rel (%p481) target = $region16
        $region15: #{tpu_custom_call.1} parent=11 // pred_region
          _
        $region16: #{tpu_custom_call.1} parent=11 // pred_fallthru
          _
        // Predicated region
        $region17: #{tpu_custom_call.1} parent=11 // pred_check
          %p484 = pneg %p116
        $region18: #{tpu_custom_call.1} parent=11 // pred_check_branch
          %486 = sbr.rel (%p484) target = $region20
        $region19: #{tpu_custom_call.1} parent=11 // pred_region
          _
        $region20: #{tpu_custom_call.1} parent=11 // pred_fallthru
          _
        // Predicated region
        $region21: #{tpu_custom_call.1} parent=11 // pred_check
          %p487 = pneg %p137
        $region22: #{tpu_custom_call.1} parent=11 // pred_check_branch
          %489 = sbr.rel (%p487) target = $region24
        $region23: #{tpu_custom_call.1} parent=11 // pred_region
          _
        $region24: #{tpu_custom_call.1} parent=11 // pred_fallthru
          _
        // Predicated region
        $region25: #{tpu_custom_call.1} parent=11 // pred_check
          %p490 = pneg %p158
        $region26: #{tpu_custom_call.1} parent=11 // pred_check_branch
          %492 = sbr.rel (%p490) target = $region28
        $region27: #{tpu_custom_call.1} parent=11 // pred_region
          _
        $region28: #{tpu_custom_call.1} parent=11 // pred_fallthru
          _
        // Predicated region
        $region29: #{tpu_custom_call.1} parent=11 // pred_check
          %p493 = pneg %p179
        $region30: #{tpu_custom_call.1} parent=11 // pred_check_branch
          %495 = sbr.rel (%p493) target = $region32
        $region31: #{tpu_custom_call.1} parent=11 // pred_region
          _
        $region32: #{tpu_custom_call.1} parent=11 // pred_fallthru
          _
        // Predicated region
        $region33: #{tpu_custom_call.1} parent=11 // pred_check
          %p496 = pneg %p200
        $region34: #{tpu_custom_call.1} parent=11 // pred_check_branch
          %498 = sbr.rel (%p496) target = $region36
        $region35: #{tpu_custom_call.1} parent=11 // pred_region
          %s500 = ssub.s32 16, 16
          %501 = vsyncadd [#allocation13], %s500
          %s503 = sshll.u32 [#allocation12], 4
          %s504 = int_to_ptr.vmem [resolvable:$true] %s503
          %506 = dma.hbm_to_vmem [thread:$0]  %s6, 16, %s504, [#allocation13]
        $region36: #{tpu_custom_call.1} parent=11 // pred_fallthru
          _
        // Predicated region
        $region37: #{tpu_custom_call.1} parent=11 // pred_check
          %p507 = pneg %p221
        $region38: #{tpu_custom_call.1} parent=11 // pred_check_branch
          %509 = sbr.rel (%p507) target = $region40
        $region39: #{tpu_custom_call.1} parent=11 // pred_region
          %s511 = ssub.s32 256, 256
          %512 = vsyncadd [#allocation13], %s511
          %s513 = sshll.u32 [#allocation14], 4
          %s514 = int_to_ptr.vmem [resolvable:$true] %s513
          %519 = dma.hbm_to_vmem [thread:$0]  %s7, 256, %s514, [#allocation13], 64, 64, 4
        $region40: #{tpu_custom_call.1} parent=11 // pred_fallthru
          _
        // Predicated region
        $region41: #{tpu_custom_call.1} parent=11 // pred_check
          %p520 = pneg %p242
        $region42: #{tpu_custom_call.1} parent=11 // pred_check_branch
          %522 = sbr.rel (%p520) target = $region44
        $region43: #{tpu_custom_call.1} parent=11 // pred_region
          %s524 = ssub.s32 16, 16
          %525 = vsyncadd [#allocation16], %s524
          %s527 = sshll.u32 [#allocation15], 4
          %s528 = int_to_ptr.vmem [resolvable:$true] %s527
          %530 = dma.hbm_to_vmem [thread:$0]  %s8, 16, %s528, [#allocation16]
        $region44: #{tpu_custom_call.1} parent=11 // pred_fallthru
          _
        // Predicated region
        $region45: #{tpu_custom_call.1} parent=11 // pred_check
          %p531 = pneg %p263
        $region46: #{tpu_custom_call.1} parent=11 // pred_check_branch
          %533 = sbr.rel (%p531) target = $region48
        $region47: #{tpu_custom_call.1} parent=11 // pred_region
          %s535 = ssub.s32 16, 16
          %536 = vsyncadd [#allocation16], %s535
          %s538 = sshll.u32 [#allocation17], 4
          %s539 = int_to_ptr.vmem [resolvable:$true] %s538
          %541 = dma.hbm_to_vmem [thread:$0]  %s9, 16, %s539, [#allocation16]
        $region48: #{tpu_custom_call.1} parent=11 // pred_fallthru
          _
        // Predicated region
        $region49: #{tpu_custom_call.1} parent=11 // pred_check
          %p542 = pneg %p284
        $region50: #{tpu_custom_call.1} parent=11 // pred_check_branch
          %544 = sbr.rel (%p542) target = $region52
        $region51: #{tpu_custom_call.1} parent=11 // pred_region
          _
        $region52: #{tpu_custom_call.1} parent=11 // pred_fallthru
          _
        // Predicated region
        $region53: #{tpu_custom_call.1} parent=11 // pred_check
          %p545 = pneg %p305
        $region54: #{tpu_custom_call.1} parent=11 // pred_check_branch
          %547 = sbr.rel (%p545) target = $region56
        $region55: #{tpu_custom_call.1} parent=11 // pred_region
          _
        $region56: #{tpu_custom_call.1} parent=11 // pred_fallthru
          _
        // Predicated region
        $region57: #{tpu_custom_call.1} parent=11 // pred_check
          %p548 = pneg %p326
        $region58: #{tpu_custom_call.1} parent=11 // pred_check_branch
          %550 = sbr.rel (%p548) target = $region60
        $region59: #{tpu_custom_call.1} parent=11 // pred_region
          _
        $region60: #{tpu_custom_call.1} parent=11 // pred_fallthru
          _
        // Predicated region
        $region61: #{tpu_custom_call.1} parent=11 // pred_check
          %p551 = pneg %p347
        $region62: #{tpu_custom_call.1} parent=11 // pred_check_branch
          %553 = sbr.rel (%p551) target = $region64
        $region63: #{tpu_custom_call.1} parent=11 // pred_region
          _
        $region64: #{tpu_custom_call.1} parent=11 // pred_fallthru
          _
        // Predicated region
        $region65: #{tpu_custom_call.1} parent=11 // pred_check
          %p554 = pneg %p368
        $region66: #{tpu_custom_call.1} parent=11 // pred_check_branch
          %556 = sbr.rel (%p554) target = $region68
        $region67: #{tpu_custom_call.1} parent=11 // pred_region
          _
        $region68: #{tpu_custom_call.1} parent=11 // pred_fallthru
          _
        // Predicated region
        $region69: #{tpu_custom_call.1} parent=11 // pred_check
          %p557 = pneg %p389
        $region70: #{tpu_custom_call.1} parent=11 // pred_check_branch
          %559 = sbr.rel (%p557) target = $region72
        $region71: #{tpu_custom_call.1} parent=11 // pred_region
          _
        $region72: #{tpu_custom_call.1} parent=11 // pred_fallthru
          _
        // Predicated region
        $region73: #{tpu_custom_call.1} parent=11 // pred_check
          %p560 = pneg %p410
        $region74: #{tpu_custom_call.1} parent=11 // pred_check_branch
          %562 = sbr.rel (%p560) target = $region76
        $region75: #{tpu_custom_call.1} parent=11 // pred_region
          _
        $region76: #{tpu_custom_call.1} parent=11 // pred_fallthru
          _
      $region12: #{tpu_custom_call.1} parent=5 // pred_fallthru
        _
      %p563 = scmp.lt.s32.totalorder %s36, 2
      // Predicated region
      $region77: #{tpu_custom_call.1} parent=5 // pred_check
        %p564 = pneg %p563
      $region78: #{tpu_custom_call.1} parent=5 // pred_check_branch
        %566 = sbr.rel (%p564) target = $region80
      $region79: #{tpu_custom_call.1} parent=5 // pred_region
        // Predicated region
        $region81: #{tpu_custom_call.1} parent=79 // pred_check
          %p567 = pneg %p68
        $region82: #{tpu_custom_call.1} parent=79 // pred_check_branch
          %569 = sbr.rel (%p567) target = $region84
        $region83: #{tpu_custom_call.1} parent=79 // pred_region
          %s570 = sand.u32 %s58, 1
          %s571 = scalar_lea.sflag [#allocation10], %s570
          %s572 = sand.u32 %s58, 1
          %s573 = smul.addr %s572, 4
          %s574 = scalar_lea.vmem [#allocation9], %s573
          %s576 = ssub.s32 64, 64
          %577 = vsyncadd %s571, %s576
          %s578 = smul.addr %s43, 64
          %s579 = scalar_lea.hbm %s0, %s578
          %s581 = sshll.u32 %s574, 4
          %s582 = int_to_ptr.vmem [resolvable:$true] %s581
          %584 = dma.hbm_to_vmem [thread:$0]  %s579, 64, %s582, %s571
        $region84: #{tpu_custom_call.1} parent=79 // pred_fallthru
          _
      $region80: #{tpu_custom_call.1} parent=5 // pred_fallthru
        _
      %p585 = scmp.le.s32.totalorder 1, %s36
      %p586 = scmp.lt.s32.totalorder %s36, 3
      %p587 = pnand %p585, %p586
      %p588 = pneg %p587
      // Predicated region
      $region85: #{tpu_custom_call.1} parent=5 // pred_check
        _
      $region86: #{tpu_custom_call.1} parent=5 // pred_check_branch
        %590 = sbr.rel (%p587) target = $region88
      $region87: #{tpu_custom_call.1} parent=5 // pred_region
        %s591 = ssub.s32 %s36, 1
        %s592 = sand.u32 %s61, 1
        %s593 = scalar_lea.sflag [#allocation10], %s592
        %s594 = sand.u32 %s61, 1
        %s595 = smul.addr %s594, 4
        %s596 = scalar_lea.vmem [#allocation9], %s595
        // Predicated region
        $region89: #{tpu_custom_call.1} parent=87 // pred_check
          %p597 = pneg %p74
        $region90: #{tpu_custom_call.1} parent=87 // pred_check_branch
          %599 = sbr.rel (%p597) target = $region92
        $region91: #{tpu_custom_call.1} parent=87 // pred_region
          %600 = dma.done %s593, 64
        $region92: #{tpu_custom_call.1} parent=87 // pred_fallthru
          _
        // Predicated region
        $region93: #{tpu_custom_call.1} parent=87 // pred_check
          %p601 = pneg %p200
        $region94: #{tpu_custom_call.1} parent=87 // pred_check_branch
          %603 = sbr.rel (%p601) target = $region96
        $region95: #{tpu_custom_call.1} parent=87 // pred_region
          %604 = dma.done [#allocation13], 16
        $region96: #{tpu_custom_call.1} parent=87 // pred_fallthru
          _
        // Predicated region
        $region97: #{tpu_custom_call.1} parent=87 // pred_check
          %p605 = pneg %p221
        $region98: #{tpu_custom_call.1} parent=87 // pred_check_branch
          %607 = sbr.rel (%p605) target = $region100
        $region99: #{tpu_custom_call.1} parent=87 // pred_region
          %608 = dma.done [#allocation13], 256
        $region100: #{tpu_custom_call.1} parent=87 // pred_fallthru
          _
        // Predicated region
        $region101: #{tpu_custom_call.1} parent=87 // pred_check
          %p609 = pneg %p242
        $region102: #{tpu_custom_call.1} parent=87 // pred_check_branch
          %611 = sbr.rel (%p609) target = $region104
        $region103: #{tpu_custom_call.1} parent=87 // pred_region
          %612 = dma.done [#allocation16], 16
        $region104: #{tpu_custom_call.1} parent=87 // pred_fallthru
          _
        // Predicated region
        $region105: #{tpu_custom_call.1} parent=87 // pred_check
          %p613 = pneg %p263
        $region106: #{tpu_custom_call.1} parent=87 // pred_check_branch
          %615 = sbr.rel (%p613) target = $region108
        $region107: #{tpu_custom_call.1} parent=87 // pred_region
          %616 = dma.done [#allocation16], 16
        $region108: #{tpu_custom_call.1} parent=87 // pred_fallthru
          _
        %s617 = sand.u32 %s61, 1
        %s618 = scalar_lea.sflag [#allocation10], %s617
        %s619 = sand.u32 %s61, 1
        %s620 = smul.addr %s619, 4
        %s621 = scalar_lea.vmem [#allocation9], %s620
        %p622 = pneg %p74
        %p623 = pneg %p71
        %p624 = pneg %p95
        %p625 = pneg %p92
        %p626 = pneg %p116
        %p627 = pneg %p113
        %p628 = pneg %p137
        %p629 = pneg %p134
        %p630 = pneg %p158
        %p631 = pneg %p155
        %p632 = pneg %p179
        %p633 = pneg %p176
        %p634 = pneg %p200
        %p635 = pneg %p197
        %p636 = pneg %p221
        %p637 = pneg %p218
        %p638 = pneg %p242
        %p639 = pneg %p239
        %p640 = pneg %p263
        %p641 = pneg %p260
        %p642 = pneg %p284
        %p643 = pneg %p281
        %p644 = pneg %p305
        %p645 = pneg %p302
        %p646 = pneg %p326
        %p647 = pneg %p323
        %p648 = pneg %p347
        %p649 = pneg %p344
        %p650 = pneg %p368
        %p651 = pneg %p365
        %p652 = pneg %p389
        %p653 = pneg %p386
        %p654 = pneg %p410
        %p655 = pneg %p407
        %p656 = pneg %p438
        %p657 = pneg %p435
        %s658 = sand.u32 %s425, 1
        %s659 = scalar_lea.sflag [#allocation11], %s658
        %s660 = sand.u32 %s425, 1
        %s661 = smul.addr %s660, 8
        %s662 = scalar_lea.vmem [#allocation18], %s661
        %p663 = pneg %p466
        %p664 = pneg %p463
        %s665 = sand.u32 %s453, 1
        %s666 = scalar_lea.sflag [#allocation20], %s665
        %s667 = sand.u32 %s453, 1
        %s668 = smul.addr %s667, 8
        %s669 = scalar_lea.vmem [#allocation19], %s668
        %p671 = scmp.eq.s32.totalorder %s46, 0
        // Predicated region
        $region109: #{tpu_custom_call.1} parent=87 // pred_check
          %p672 = pneg %p671
        $region110: #{tpu_custom_call.1} parent=87 // pred_check_branch
          %674 = sbr.rel (%p672) target = $region112
        $region111: #{tpu_custom_call.1} parent=87 // pred_region
          %v675 = vld [vmem:[%s596] sm:$0xf]
          %v676 = vunpack.c.l.bf16 %v675
          %v677 = vld [vmem:[#allocation17] sm:$0x1]
          %v678 = vld [vmem:[%s10] sm:$0x1]
          %vm679 = vcmask 261120
          %v680 = vsel %vm679, %v676, 0.0
          %681 = vadd.xlane.f32.xlu0 %v680
          %v682 = vpop.xlane.xlu0 %681
          %v683 = vrcp.pop 32.0
          %v684 = vmul.f32 %v682, %v683
          %v685 = vsub.f32 %v676, %v684
          %v686 = vmul.f32 %v685, %v685
          %v687 = vsel %vm679, %v686, 0.0
          %688 = vadd.xlane.f32.xlu0 %v687
          %v689 = vpop.xlane.xlu0 %688
          %v690 = vmul.f32 %v689, %v683
          %v691 = vadd.f32 %v690, 1e-05
          %v692 = vrsqrt.pop %v691
          %v693 = vmul.f32 %v685, %v692
          %v695 = vlaneseq
          %v696 = vshrl.u32 %v695, 7
          %v697 = vsub.s32 0, %v696
          %v698 = vrot.slane %v677, %v697
          %v700 = vmul.f32 %v693, %v698
          %v702 = vlaneseq
          %v703 = vshrl.u32 %v702, 7
          %v704 = vsub.s32 0, %v703
          %v705 = vrot.slane %v678, %v704
          %v707 = vadd.f32 %v700, %v705
          %708 = vst.msk [vmem:[#allocation2] sm:$0xff] %vm679, %v707
          %v709 = vpack.c.bf16 %v707, %v707
          %v710 = vld [vmem:[%s1] sm:$0xf]
          %v711 = vld [vmem:[%s1 + $0x4] sm:$0xf]
          %v712 = vld [vmem:[%s1 + $0x8] sm:$0xf]
          %v713 = vld [vmem:[%s1 + $0xc] sm:$0xf]
          %v714 = vld [vmem:[%s4] sm:$0x1]
          %v716 = vlaneseq
          %v717 = vshrl.u32 %v716, 7
          %v718 = vsub.s32 0, %v717
          %v719 = vrot.slane %v714, %v718
          %v725 = vunpack.c.l.b16 %v710
          %v726 = vunpack.c.l.b16 %v711
          %v727 = vunpack.c.l.b16 %v712
          %v728 = vunpack.c.l.b16 %v713
          %v729 = vpack.c.b16 %v726, %v725
          %v730 = vpack.c.b16 %v728, %v727
          %v734 = vsel %vm679, %v709, 0
          %736 = vmatprep.subr.bf16.mxu0 0
          %737 = vmatpush1.bf16.msra.mxu0 %v729
          %738 = vmatprep.subr.bf16.mxu0 0
          %739 = vmatpush1.bf16.msra.mxu0 %v730
          %740 = vmatprep.subr.bf16.mxu0 0
          %741 = vmatpush1.bf16.msra.mxu0 0
          %742 = vmatprep.subr.bf16.mxu0 0
          %743 = vmatpush1.bf16.msra.mxu0 0
          %744 = vmatprep.subr.bf16.mxu0 0
          %745 = vmatpush1.bf16.msra.mxu0 0
          %746 = vmatprep.subr.bf16.mxu0 0
          %747 = vmatpush1.bf16.msra.mxu0 0
          %748 = vmatprep.subr.bf16.mxu0 0
          %749 = vmatpush1.bf16.msra.mxu0 0
          %750 = vmatprep.subr.bf16.mxu0 0
          %751 = vmatpush1.bf16.msra.mxu0 0
          %752 = vmatprep.subr.bf16.mxu0 0
          %753 = vmatpush1.bf16.msra.mxu0 0
          %754 = vmatprep.subr.bf16.mxu0 0
          %755 = vmatpush1.bf16.msra.mxu0 0
          %756 = vmatprep.subr.bf16.mxu0 0
          %757 = vmatpush1.bf16.msra.mxu0 0
          %758 = vmatprep.subr.bf16.mxu0 0
          %759 = vmatpush1.bf16.msra.mxu0 0
          %760 = vmatprep.subr.bf16.mxu0 0
          %761 = vmatpush1.bf16.msra.mxu0 0
          %762 = vmatprep.subr.bf16.mxu0 0
          %763 = vmatpush1.bf16.msra.mxu0 0
          %764 = vmatprep.subr.bf16.mxu0 0
          %765 = vmatpush1.bf16.msra.mxu0 0
          %766 = vmatprep.subr.bf16.mxu0 0
          %767 = vmatpush1.bf16.msra.mxu0 0
          %768 = vmatprep.mubr.bf16.mxu0 0
          %769 = vmatmul.mubr.bf16.gmra.mrb[0].mxu0 %v734
          %v770 = vpop.f32.mrb[0].mxu0
          %v771 = vadd.f32 %v719, %v770
          %v772 = vpop.f32.mrb[0].mxu0
          %v773 = vpop.f32.mrb[0].mxu0
          %v774 = vpop.f32.mrb[0].mxu0
          %775 = vdwg.mxu0
          %v776 = vmul.f32 %v771, 0.35355338
          %v777 = vpack.c.bf16 %v776, %v776
          %vm778 = vcmask 257024
          %779 = vst.msk [vmem:[#allocation3] sm:$0xf] %vm778, %v777
          %v780 = vld [vmem:[%s2] sm:$0xf]
          %v781 = vld [vmem:[%s2 + $0x4] sm:$0xf]
          %v782 = vld [vmem:[%s2 + $0x8] sm:$0xf]
          %v783 = vld [vmem:[%s2 + $0xc] sm:$0xf]
          %v784 = vld [vmem:[%s5] sm:$0x1]
          %v786 = vlaneseq
          %v787 = vshrl.u32 %v786, 7
          %v788 = vsub.s32 0, %v787
          %v789 = vrot.slane %v784, %v788
          %v795 = vunpack.c.l.b16 %v780
          %v796 = vunpack.c.l.b16 %v781
          %v797 = vunpack.c.l.b16 %v782
          %v798 = vunpack.c.l.b16 %v783
          %v799 = vpack.c.b16 %v796, %v795
          %v800 = vpack.c.b16 %v798, %v797
          %803 = vmatprep.subr.bf16.mxu0 0
          %804 = vmatpush1.bf16.msra.mxu0 %v799
          %805 = vmatprep.subr.bf16.mxu0 0
          %806 = vmatpush1.bf16.msra.mxu0 %v800
          %807 = vmatprep.subr.bf16.mxu0 0
          %808 = vmatpush1.bf16.msra.mxu0 0
          %809 = vmatprep.subr.bf16.mxu0 0
          %810 = vmatpush1.bf16.msra.mxu0 0
          %811 = vmatprep.subr.bf16.mxu0 0
          %812 = vmatpush1.bf16.msra.mxu0 0
          %813 = vmatprep.subr.bf16.mxu0 0
          %814 = vmatpush1.bf16.msra.mxu0 0
          %815 = vmatprep.subr.bf16.mxu0 0
          %816 = vmatpush1.bf16.msra.mxu0 0
          %817 = vmatprep.subr.bf16.mxu0 0
          %818 = vmatpush1.bf16.msra.mxu0 0
          %819 = vmatprep.subr.bf16.mxu0 0
          %820 = vmatpush1.bf16.msra.mxu0 0
          %821 = vmatprep.subr.bf16.mxu0 0
          %822 = vmatpush1.bf16.msra.mxu0 0
          %823 = vmatprep.subr.bf16.mxu0 0
          %824 = vmatpush1.bf16.msra.mxu0 0
          %825 = vmatprep.subr.bf16.mxu0 0
          %826 = vmatpush1.bf16.msra.mxu0 0
          %827 = vmatprep.subr.bf16.mxu0 0
          %828 = vmatpush1.bf16.msra.mxu0 0
          %829 = vmatprep.subr.bf16.mxu0 0
          %830 = vmatpush1.bf16.msra.mxu0 0
          %831 = vmatprep.subr.bf16.mxu0 0
          %832 = vmatpush1.bf16.msra.mxu0 0
          %833 = vmatprep.subr.bf16.mxu0 0
          %834 = vmatpush1.bf16.msra.mxu0 0
          %835 = vmatprep.mubr.bf16.mxu0 0
          %836 = vmatmul.mubr.bf16.gmra.mrb[0].mxu0 %v734
          %v837 = vpop.f32.mrb[0].mxu0
          %v838 = vadd.f32 %v789, %v837
          %v839 = vpop.f32.mrb[0].mxu0
          %v840 = vpop.f32.mrb[0].mxu0
          %v841 = vpop.f32.mrb[0].mxu0
          %842 = vdwg.mxu0
          %843 = vxpose.xlu0.b32.start [1/16] %v838, 128
          %844 = vxpose.xlu0.b32.cont [2/16] 0.0, 128
          %845 = vxpose.xlu0.b32.cont [3/16] 0.0, 128
          %846 = vxpose.xlu0.b32.cont [4/16] 0.0, 128
          %847 = vxpose.xlu0.b32.cont [5/16] 0.0, 128
          %848 = vxpose.xlu0.b32.cont [6/16] 0.0, 128
          %849 = vxpose.xlu0.b32.cont [7/16] 0.0, 128
          %850 = vxpose.xlu0.b32.cont [8/16] 0.0, 128
          %851 = vxpose.xlu0.b32.cont [9/16] 0.0, 128
          %852 = vxpose.xlu0.b32.cont [10/16] 0.0, 128
          %853 = vxpose.xlu0.b32.cont [11/16] 0.0, 128
          %854 = vxpose.xlu0.b32.cont [12/16] 0.0, 128
          %855 = vxpose.xlu0.b32.cont [13/16] 0.0, 128
          %856 = vxpose.xlu0.b32.cont [14/16] 0.0, 128
          %857 = vxpose.xlu0.b32.cont [15/16] 0.0, 128
          %858 = vxpose.xlu0.b32.end [16/16] 0.0, 128
          %v859 = vpop.trf.xlu0
          %v860 = vpop.trf.xlu0
          %v861 = vpop.trf.xlu0
          %v862 = vpop.trf.xlu0
          %v863 = vpop.trf.xlu0
          %v864 = vpop.trf.xlu0
          %v865 = vpop.trf.xlu0
          %v866 = vpop.trf.xlu0
          %v867 = vpop.trf.xlu0
          %v868 = vpop.trf.xlu0
          %v869 = vpop.trf.xlu0
          %v870 = vpop.trf.xlu0
          %v871 = vpop.trf.xlu0
          %v872 = vpop.trf.xlu0
          %v873 = vpop.trf.xlu0
          %v874 = vpop.trf.xlu0
          %v875 = vpack.c.bf16 %v860, %v859
          %v876 = vpack.c.bf16 %v862, %v861
          %vm877 = vcmask 64512
          %878 = vst.msk [vmem:[#allocation4] sm:$0xff] %vm877, %v875
          %879 = vst.msk [vmem:[#allocation4 + $0x8] sm:$0xff] %vm877, %v876
          %v880 = vld [vmem:[%s3] sm:$0xf]
          %v881 = vld [vmem:[%s3 + $0x4] sm:$0xf]
          %v882 = vld [vmem:[%s3 + $0x8] sm:$0xf]
          %v883 = vld [vmem:[%s3 + $0xc] sm:$0xf]
          %v884 = vld [vmem:[#allocation12] sm:$0x1]
          %v886 = vlaneseq
          %v887 = vshrl.u32 %v886, 7
          %v888 = vsub.s32 0, %v887
          %v889 = vrot.slane %v884, %v888
          %v895 = vunpack.c.l.b16 %v880
          %v896 = vunpack.c.l.b16 %v881
          %v897 = vunpack.c.l.b16 %v882
          %v898 = vunpack.c.l.b16 %v883
          %v899 = vpack.c.b16 %v896, %v895
          %v900 = vpack.c.b16 %v898, %v897
          %903 = vmatprep.subr.bf16.mxu0 0
          %904 = vmatpush1.bf16.msra.mxu0 %v899
          %905 = vmatprep.subr.bf16.mxu0 0
          %906 = vmatpush1.bf16.msra.mxu0 %v900
          %907 = vmatprep.subr.bf16.mxu0 0
          %908 = vmatpush1.bf16.msra.mxu0 0
          %909 = vmatprep.subr.bf16.mxu0 0
          %910 = vmatpush1.bf16.msra.mxu0 0
          %911 = vmatprep.subr.bf16.mxu0 0
          %912 = vmatpush1.bf16.msra.mxu0 0
          %913 = vmatprep.subr.bf16.mxu0 0
          %914 = vmatpush1.bf16.msra.mxu0 0
          %915 = vmatprep.subr.bf16.mxu0 0
          %916 = vmatpush1.bf16.msra.mxu0 0
          %917 = vmatprep.subr.bf16.mxu0 0
          %918 = vmatpush1.bf16.msra.mxu0 0
          %919 = vmatprep.subr.bf16.mxu0 0
          %920 = vmatpush1.bf16.msra.mxu0 0
          %921 = vmatprep.subr.bf16.mxu0 0
          %922 = vmatpush1.bf16.msra.mxu0 0
          %923 = vmatprep.subr.bf16.mxu0 0
          %924 = vmatpush1.bf16.msra.mxu0 0
          %925 = vmatprep.subr.bf16.mxu0 0
          %926 = vmatpush1.bf16.msra.mxu0 0
          %927 = vmatprep.subr.bf16.mxu0 0
          %928 = vmatpush1.bf16.msra.mxu0 0
          %929 = vmatprep.subr.bf16.mxu0 0
          %930 = vmatpush1.bf16.msra.mxu0 0
          %931 = vmatprep.subr.bf16.mxu0 0
          %932 = vmatpush1.bf16.msra.mxu0 0
          %933 = vmatprep.subr.bf16.mxu0 0
          %934 = vmatpush1.bf16.msra.mxu0 0
          %935 = vmatprep.mubr.bf16.mxu0 0
          %936 = vmatmul.mubr.bf16.gmra.mrb[0].mxu0 %v734
          %v937 = vpop.f32.mrb[0].mxu0
          %v938 = vadd.f32 %v889, %v937
          %v939 = vpop.f32.mrb[0].mxu0
          %v940 = vpop.f32.mrb[0].mxu0
          %v941 = vpop.f32.mrb[0].mxu0
          %942 = vdwg.mxu0
          %v943 = vpack.c.bf16 %v938, %v938
          %944 = vst.msk [vmem:[#allocation5] sm:$0xf] %vm778, %v943
        $region112: #{tpu_custom_call.1} parent=87 // pred_fallthru
          _
        %s945 = smul.u32 %s46, 8
        %s946 = scalar_lea.vmem [#allocation2], %s945
        %v947 = vld [vmem:[%s946] sm:$0xff]
        %s948 = sshra.s32 %s945, 3
        %s949 = sand.u32 %s945, 7
        %s950 = smul.addr %s948, 4
        %s951 = scalar_lea.vmem [#allocation3], %s950
        %v952 = vld [vmem:[%s951] sm:$0xf]
        %vm953 = vcmask 64512
        %954 = vst.msk [vmem:[#allocation6] sm:$0xff] %vm953, -1e+30
        %p955 = scmp.ge.s32.totalorder %s46, 0
        // Predicated region
        $region113: #{tpu_custom_call.1} parent=87 // pred_check
          %p956 = pneg %p955
        $region114: #{tpu_custom_call.1} parent=87 // pred_check_branch
          %958 = sbr.rel (%p956) target = $region116
        $region115: #{tpu_custom_call.1} parent=87 // pred_region
          %v959 = vld [vmem:[#allocation4] sm:$0xf]
          %v961 = vsel %vm953, %v952, 0
          %vm963 = vcmask 1043456
          %v965 = vsel %vm963, %v959, 0
          %967 = vmatprep.subr.bf16.mxu0 0
          %968 = vmatpush1.bf16.msra.mxu0 %v965
          %969 = vmatprep.subr.bf16.mxu0 0
          %970 = vmatpush1.bf16.msra.mxu0 0
          %971 = vmatprep.subr.bf16.mxu0 0
          %972 = vmatpush1.bf16.msra.mxu0 0
          %973 = vmatprep.subr.bf16.mxu0 0
          %974 = vmatpush1.bf16.msra.mxu0 0
          %975 = vmatprep.subr.bf16.mxu0 0
          %976 = vmatpush1.bf16.msra.mxu0 0
          %977 = vmatprep.subr.bf16.mxu0 0
          %978 = vmatpush1.bf16.msra.mxu0 0
          %979 = vmatprep.subr.bf16.mxu0 0
          %980 = vmatpush1.bf16.msra.mxu0 0
          %981 = vmatprep.subr.bf16.mxu0 0
          %982 = vmatpush1.bf16.msra.mxu0 0
          %983 = vmatprep.subr.bf16.mxu0 0
          %984 = vmatpush1.bf16.msra.mxu0 0
          %985 = vmatprep.subr.bf16.mxu0 0
          %986 = vmatpush1.bf16.msra.mxu0 0
          %987 = vmatprep.subr.bf16.mxu0 0
          %988 = vmatpush1.bf16.msra.mxu0 0
          %989 = vmatprep.subr.bf16.mxu0 0
          %990 = vmatpush1.bf16.msra.mxu0 0
          %991 = vmatprep.subr.bf16.mxu0 0
          %992 = vmatpush1.bf16.msra.mxu0 0
          %993 = vmatprep.subr.bf16.mxu0 0
          %994 = vmatpush1.bf16.msra.mxu0 0
          %995 = vmatprep.subr.bf16.mxu0 0
          %996 = vmatpush1.bf16.msra.mxu0 0
          %997 = vmatprep.subr.bf16.mxu0 0
          %998 = vmatpush1.bf16.msra.mxu0 0
          %999 = vmatprep.mubr.bf16.mxu0 0
          %1000 = vmatmul.mubr.bf16.gmra.mrb[0].mxu0 %v961
          %v1001 = vpop.f32.mrb[0].mxu0
          %v1002 = vadd.f32 0.0, %v1001
          %v1003 = vpop.f32.mrb[0].mxu0
          %v1004 = vpop.f32.mrb[0].mxu0
          %v1005 = vpop.f32.mrb[0].mxu0
          %1006 = vdwg.mxu0
          %v1007 = vlaneseq
          %v1008 = vshrl.u32 %v1007, 7
          %v1009 = vstv %s945
          %v1010 = vadd.s32 %v1009, %v1008
          %v1011 = vlaneseq
          %v1012 = vand.u32 %v1011, 127
          %vm1013 = vcmp.le.s32.totalorder %v1012, %v1010
          %v1014 = vsel %vm1013, %v1002, -1e+30
          %1015 = vst.msk [vmem:[#allocation6] sm:$0xff] %vm953, %v1014
        $region116: #{tpu_custom_call.1} parent=87 // pred_fallthru
          _
        %v1016 = vld [vmem:[#allocation6] sm:$0xff]
        %v1017 = vsel %vm953, %v1016, -inf
        %1018 = vmax.xlane.f32.xlu0 %v1017
        %v1019 = vpop.xlane.xlu0 %1018
        %v1020 = vsub.f32 %v1016, %v1019
        %v1021 = vmul.f32 %v1020, 1.442695
        %v1022 = vpow.pop %v1021
        %v1023 = vsel %vm953, %v1022, 0.0
        %1024 = vadd.xlane.f32.xlu0 %v1023
        %v1025 = vpop.xlane.xlu0 %1024
        %v1026 = vrcp.pop %v1025
        %v1027 = vmul.f32 %v1022, %v1026
        %v1028 = vadd.f32 %v1027, 0.0
        %v1029 = vpack.c.bf16 %v1027, %v1027
        %1030 = vst.msk [vmem:[#allocation8] sm:$0xff] %vm953, 0.0
        // Predicated region
        $region117: #{tpu_custom_call.1} parent=87 // pred_check
          %p1031 = pneg %p955
        $region118: #{tpu_custom_call.1} parent=87 // pred_check_branch
          %1033 = sbr.rel (%p1031) target = $region120
        $region119: #{tpu_custom_call.1} parent=87 // pred_region
          %v1034 = vld [vmem:[#allocation8] sm:$0xff]
          %v1035 = vld [vmem:[#allocation5] sm:$0xf]
          %v1037 = vsel %vm953, %v1029, 0
          %vm1039 = vcmask 1043456
          %v1041 = vsel %vm1039, %v1035, 0
          %1043 = vmatprep.subr.bf16.mxu0 0
          %1044 = vmatpush1.bf16.msra.mxu0 %v1041
          %1045 = vmatprep.subr.bf16.mxu0 0
          %1046 = vmatpush1.bf16.msra.mxu0 0
          %1047 = vmatprep.subr.bf16.mxu0 0
          %1048 = vmatpush1.bf16.msra.mxu0 0
          %1049 = vmatprep.subr.bf16.mxu0 0
          %1050 = vmatpush1.bf16.msra.mxu0 0
          %1051 = vmatprep.subr.bf16.mxu0 0
          %1052 = vmatpush1.bf16.msra.mxu0 0
          %1053 = vmatprep.subr.bf16.mxu0 0
          %1054 = vmatpush1.bf16.msra.mxu0 0
          %1055 = vmatprep.subr.bf16.mxu0 0
          %1056 = vmatpush1.bf16.msra.mxu0 0
          %1057 = vmatprep.subr.bf16.mxu0 0
          %1058 = vmatpush1.bf16.msra.mxu0 0
          %1059 = vmatprep.subr.bf16.mxu0 0
          %1060 = vmatpush1.bf16.msra.mxu0 0
          %1061 = vmatprep.subr.bf16.mxu0 0
          %1062 = vmatpush1.bf16.msra.mxu0 0
          %1063 = vmatprep.subr.bf16.mxu0 0
          %1064 = vmatpush1.bf16.msra.mxu0 0
          %1065 = vmatprep.subr.bf16.mxu0 0
          %1066 = vmatpush1.bf16.msra.mxu0 0
          %1067 = vmatprep.subr.bf16.mxu0 0
          %1068 = vmatpush1.bf16.msra.mxu0 0
          %1069 = vmatprep.subr.bf16.mxu0 0
          %1070 = vmatpush1.bf16.msra.mxu0 0
          %1071 = vmatprep.subr.bf16.mxu0 0
          %1072 = vmatpush1.bf16.msra.mxu0 0
          %1073 = vmatprep.subr.bf16.mxu0 0
          %1074 = vmatpush1.bf16.msra.mxu0 0
          %1075 = vmatprep.mubr.bf16.mxu0 0
          %1076 = vmatmul.mubr.bf16.gmra.mrb[0].mxu0 %v1037
          %v1077 = vpop.f32.mrb[0].mxu0
          %v1078 = vadd.f32 0.0, %v1077
          %v1079 = vpop.f32.mrb[0].mxu0
          %v1080 = vpop.f32.mrb[0].mxu0
          %v1081 = vpop.f32.mrb[0].mxu0
          %1082 = vdwg.mxu0
          %v1083 = vadd.f32 %v1034, %v1078
          %1084 = vst.msk [vmem:[#allocation8] sm:$0xff] %vm953, %v1083
        $region120: #{tpu_custom_call.1} parent=87 // pred_fallthru
          _
        %v1085 = vld [vmem:[#allocation8] sm:$0xff]
        %v1086 = vpack.c.bf16 %v1085, %v1085
        %vm1087 = vcmask 60416
        %1088 = vst.msk [vmem:[#allocation7] sm:$0xf] %vm1087, %v1086
        // Predicated region
        $region121: #{tpu_custom_call.1} parent=87 // pred_check
          %p1089 = pneg %p955
        $region122: #{tpu_custom_call.1} parent=87 // pred_check_branch
          %1091 = sbr.rel (%p1089) target = $region124
        $region123: #{tpu_custom_call.1} parent=87 // pred_region
          %v1092 = vld [vmem:[#allocation4] sm:$0xf0]
          %v1094 = vunpack.c.l.b16 %v952
          %v1095 = vpack.c.b16 %v1094, %v1094
          %1096 = vrot.lane.b32.xlu0 %v1095, 120
          %v1097 = vpop.permute.xlu0 %1096
          %v1099 = vrot.slane %v1092, 4
          %v1101 = vsel %vm953, %v1097, 0
          %vm1103 = vcmask 1043456
          %v1105 = vsel %vm1103, %v1099, 0
          %1107 = vmatprep.subr.bf16.mxu0 0
          %1108 = vmatpush1.bf16.msra.mxu0 %v1105
          %1109 = vmatprep.subr.bf16.mxu0 0
          %1110 = vmatpush1.bf16.msra.mxu0 0
          %1111 = vmatprep.subr.bf16.mxu0 0
          %1112 = vmatpush1.bf16.msra.mxu0 0
          %1113 = vmatprep.subr.bf16.mxu0 0
          %1114 = vmatpush1.bf16.msra.mxu0 0
          %1115 = vmatprep.subr.bf16.mxu0 0
          %1116 = vmatpush1.bf16.msra.mxu0 0
          %1117 = vmatprep.subr.bf16.mxu0 0
          %1118 = vmatpush1.bf16.msra.mxu0 0
          %1119 = vmatprep.subr.bf16.mxu0 0
          %1120 = vmatpush1.bf16.msra.mxu0 0
          %1121 = vmatprep.subr.bf16.mxu0 0
          %1122 = vmatpush1.bf16.msra.mxu0 0
          %1123 = vmatprep.subr.bf16.mxu0 0
          %1124 = vmatpush1.bf16.msra.mxu0 0
          %1125 = vmatprep.subr.bf16.mxu0 0
          %1126 = vmatpush1.bf16.msra.mxu0 0
          %1127 = vmatprep.subr.bf16.mxu0 0
          %1128 = vmatpush1.bf16.msra.mxu0 0
          %1129 = vmatprep.subr.bf16.mxu0 0
          %1130 = vmatpush1.bf16.msra.mxu0 0
          %1131 = vmatprep.subr.bf16.mxu0 0
          %1132 = vmatpush1.bf16.msra.mxu0 0
          %1133 = vmatprep.subr.bf16.mxu0 0
          %1134 = vmatpush1.bf16.msra.mxu0 0
          %1135 = vmatprep.subr.bf16.mxu0 0
          %1136 = vmatpush1.bf16.msra.mxu0 0
          %1137 = vmatprep.subr.bf16.mxu0 0
          %1138 = vmatpush1.bf16.msra.mxu0 0
          %1139 = vmatprep.mubr.bf16.mxu0 0
          %1140 = vmatmul.mubr.bf16.gmra.mrb[0].mxu0 %v1101
          %v1141 = vpop.f32.mrb[0].mxu0
          %v1142 = vadd.f32 0.0, %v1141
          %v1143 = vpop.f32.mrb[0].mxu0
          %v1144 = vpop.f32.mrb[0].mxu0
          %v1145 = vpop.f32.mrb[0].mxu0
          %1146 = vdwg.mxu0
          %v1147 = vlaneseq
          %v1148 = vshrl.u32 %v1147, 7
          %v1149 = vstv %s945
          %v1150 = vadd.s32 %v1149, %v1148
          %v1151 = vlaneseq
          %v1152 = vand.u32 %v1151, 127
          %vm1153 = vcmp.le.s32.totalorder %v1152, %v1150
          %v1154 = vsel %vm1153, %v1142, -1e+30
          %1155 = vst.msk [vmem:[#allocation6] sm:$0xff] %vm953, %v1154
        $region124: #{tpu_custom_call.1} parent=87 // pred_fallthru
          _
        %v1156 = vld [vmem:[#allocation6] sm:$0xff]
        %v1157 = vsel %vm953, %v1156, -inf
        %1158 = vmax.xlane.f32.xlu0 %v1157
        %v1159 = vpop.xlane.xlu0 %1158
        %v1160 = vsub.f32 %v1156, %v1159
        %v1161 = vmul.f32 %v1160, 1.442695
        %v1162 = vpow.pop %v1161
        %v1163 = vsel %vm953, %v1162, 0.0
        %1164 = vadd.xlane.f32.xlu0 %v1163
        %v1165 = vpop.xlane.xlu0 %1164
        %v1166 = vrcp.pop %v1165
        %v1167 = vmul.f32 %v1162, %v1166
        %v1168 = vadd.f32 %v1028, %v1167
        %v1169 = vpack.c.bf16 %v1167, %v1167
        %1170 = vst.msk [vmem:[#allocation8] sm:$0xff] %vm953, 0.0
        // Predicated region
        $region125: #{tpu_custom_call.1} parent=87 // pred_check
          %p1171 = pneg %p955
        $region126: #{tpu_custom_call.1} parent=87 // pred_check_branch
          %1173 = sbr.rel (%p1171) target = $region128
        $region127: #{tpu_custom_call.1} parent=87 // pred_region
          %v1174 = vld [vmem:[#allocation8] sm:$0xff]
          %v1175 = vld [vmem:[#allocation5] sm:$0xf]
          %v1177 = vunpack.c.l.b16 %v1175
          %v1178 = vpack.c.b16 %v1177, %v1177
          %1179 = vrot.lane.b32.xlu0 %v1178, 120
          %v1180 = vpop.permute.xlu0 %1179
          %v1182 = vsel %vm953, %v1169, 0
          %vm1184 = vcmask 1043456
          %v1186 = vsel %vm1184, %v1180, 0
          %1188 = vmatprep.subr.bf16.mxu0 0
          %1189 = vmatpush1.bf16.msra.mxu0 %v1186
          %1190 = vmatprep.subr.bf16.mxu0 0
          %1191 = vmatpush1.bf16.msra.mxu0 0
          %1192 = vmatprep.subr.bf16.mxu0 0
          %1193 = vmatpush1.bf16.msra.mxu0 0
          %1194 = vmatprep.subr.bf16.mxu0 0
          %1195 = vmatpush1.bf16.msra.mxu0 0
          %1196 = vmatprep.subr.bf16.mxu0 0
          %1197 = vmatpush1.bf16.msra.mxu0 0
          %1198 = vmatprep.subr.bf16.mxu0 0
          %1199 = vmatpush1.bf16.msra.mxu0 0
          %1200 = vmatprep.subr.bf16.mxu0 0
          %1201 = vmatpush1.bf16.msra.mxu0 0
          %1202 = vmatprep.subr.bf16.mxu0 0
          %1203 = vmatpush1.bf16.msra.mxu0 0
          %1204 = vmatprep.subr.bf16.mxu0 0
          %1205 = vmatpush1.bf16.msra.mxu0 0
          %1206 = vmatprep.subr.bf16.mxu0 0
          %1207 = vmatpush1.bf16.msra.mxu0 0
          %1208 = vmatprep.subr.bf16.mxu0 0
          %1209 = vmatpush1.bf16.msra.mxu0 0
          %1210 = vmatprep.subr.bf16.mxu0 0
          %1211 = vmatpush1.bf16.msra.mxu0 0
          %1212 = vmatprep.subr.bf16.mxu0 0
          %1213 = vmatpush1.bf16.msra.mxu0 0
          %1214 = vmatprep.subr.bf16.mxu0 0
          %1215 = vmatpush1.bf16.msra.mxu0 0
          %1216 = vmatprep.subr.bf16.mxu0 0
          %1217 = vmatpush1.bf16.msra.mxu0 0
          %1218 = vmatprep.subr.bf16.mxu0 0
          %1219 = vmatpush1.bf16.msra.mxu0 0
          %1220 = vmatprep.mubr.bf16.mxu0 0
          %1221 = vmatmul.mubr.bf16.gmra.mrb[0].mxu0 %v1182
          %v1222 = vpop.f32.mrb[0].mxu0
          %v1223 = vadd.f32 0.0, %v1222
          %v1224 = vpop.f32.mrb[0].mxu0
          %v1225 = vpop.f32.mrb[0].mxu0
          %v1226 = vpop.f32.mrb[0].mxu0
          %1227 = vdwg.mxu0
          %v1228 = vadd.f32 %v1174, %v1223
          %1229 = vst.msk [vmem:[#allocation8] sm:$0xff] %vm953, %v1228
        $region128: #{tpu_custom_call.1} parent=87 // pred_fallthru
          _
        %v1230 = vld [vmem:[#allocation8] sm:$0xff]
        %v1231 = vpack.c.bf16 %v1230, %v1230
        %v1233 = vunpack.c.l.b16 %v1231
        %v1234 = vpack.c.b16 %v1233, %v1233
        %1235 = vrot.lane.b32.xlu0 %v1234, 8
        %v1236 = vpop.permute.xlu0 %1235
        %vm1238 = vcmask 126016
        %1239 = vst.msk [vmem:[#allocation7] sm:$0xf] %vm1238, %v1236
        // Predicated region
        $region129: #{tpu_custom_call.1} parent=87 // pred_check
          %p1240 = pneg %p955
        $region130: #{tpu_custom_call.1} parent=87 // pred_check_branch
          %1242 = sbr.rel (%p1240) target = $region132
        $region131: #{tpu_custom_call.1} parent=87 // pred_region
          %v1243 = vld [vmem:[#allocation4 + $0x8] sm:$0xf]
          %v1245 = vunpack.c.l.b16 %v952
          %v1246 = vpack.c.b16 %v1245, %v1245
          %1247 = vrot.lane.b32.xlu0 %v1246, 112
          %v1248 = vpop.permute.xlu0 %1247
          %v1250 = vsel %vm953, %v1248, 0
          %vm1252 = vcmask 1043456
          %v1254 = vsel %vm1252, %v1243, 0
          %1256 = vmatprep.subr.bf16.mxu0 0
          %1257 = vmatpush1.bf16.msra.mxu0 %v1254
          %1258 = vmatprep.subr.bf16.mxu0 0
          %1259 = vmatpush1.bf16.msra.mxu0 0
          %1260 = vmatprep.subr.bf16.mxu0 0
          %1261 = vmatpush1.bf16.msra.mxu0 0
          %1262 = vmatprep.subr.bf16.mxu0 0
          %1263 = vmatpush1.bf16.msra.mxu0 0
          %1264 = vmatprep.subr.bf16.mxu0 0
          %1265 = vmatpush1.bf16.msra.mxu0 0
          %1266 = vmatprep.subr.bf16.mxu0 0
          %1267 = vmatpush1.bf16.msra.mxu0 0
          %1268 = vmatprep.subr.bf16.mxu0 0
          %1269 = vmatpush1.bf16.msra.mxu0 0
          %1270 = vmatprep.subr.bf16.mxu0 0
          %1271 = vmatpush1.bf16.msra.mxu0 0
          %1272 = vmatprep.subr.bf16.mxu0 0
          %1273 = vmatpush1.bf16.msra.mxu0 0
          %1274 = vmatprep.subr.bf16.mxu0 0
          %1275 = vmatpush1.bf16.msra.mxu0 0
          %1276 = vmatprep.subr.bf16.mxu0 0
          %1277 = vmatpush1.bf16.msra.mxu0 0
          %1278 = vmatprep.subr.bf16.mxu0 0
          %1279 = vmatpush1.bf16.msra.mxu0 0
          %1280 = vmatprep.subr.bf16.mxu0 0
          %1281 = vmatpush1.bf16.msra.mxu0 0
          %1282 = vmatprep.subr.bf16.mxu0 0
          %1283 = vmatpush1.bf16.msra.mxu0 0
          %1284 = vmatprep.subr.bf16.mxu0 0
          %1285 = vmatpush1.bf16.msra.mxu0 0
          %1286 = vmatprep.subr.bf16.mxu0 0
          %1287 = vmatpush1.bf16.msra.mxu0 0
          %1288 = vmatprep.mubr.bf16.mxu0 0
          %1289 = vmatmul.mubr.bf16.gmra.mrb[0].mxu0 %v1250
          %v1290 = vpop.f32.mrb[0].mxu0
          %v1291 = vadd.f32 0.0, %v1290
          %v1292 = vpop.f32.mrb[0].mxu0
          %v1293 = vpop.f32.mrb[0].mxu0
          %v1294 = vpop.f32.mrb[0].mxu0
          %1295 = vdwg.mxu0
          %v1296 = vlaneseq
          %v1297 = vshrl.u32 %v1296, 7
          %v1298 = vstv %s945
          %v1299 = vadd.s32 %v1298, %v1297
          %v1300 = vlaneseq
          %v1301 = vand.u32 %v1300, 127
          %vm1302 = vcmp.le.s32.totalorder %v1301, %v1299
          %v1303 = vsel %vm1302, %v1291, -1e+30
          %1304 = vst.msk [vmem:[#allocation6] sm:$0xff] %vm953, %v1303
        $region132: #{tpu_custom_call.1} parent=87 // pred_fallthru
          _
        %v1305 = vld [vmem:[#allocation6] sm:$0xff]
        %v1306 = vsel %vm953, %v1305, -inf
        %1307 = vmax.xlane.f32.xlu0 %v1306
        %v1308 = vpop.xlane.xlu0 %1307
        %v1309 = vsub.f32 %v1305, %v1308
        %v1310 = vmul.f32 %v1309, 1.442695
        %v1311 = vpow.pop %v1310
        %v1312 = vsel %vm953, %v1311, 0.0
        %1313 = vadd.xlane.f32.xlu0 %v1312
        %v1314 = vpop.xlane.xlu0 %1313
        %v1315 = vrcp.pop %v1314
        %v1316 = vmul.f32 %v1311, %v1315
        %v1317 = vadd.f32 %v1168, %v1316
        %v1318 = vpack.c.bf16 %v1316, %v1316
        %1319 = vst.msk [vmem:[#allocation8] sm:$0xff] %vm953, 0.0
        // Predicated region
        $region133: #{tpu_custom_call.1} parent=87 // pred_check
          %p1320 = pneg %p955
        $region134: #{tpu_custom_call.1} parent=87 // pred_check_branch
          %1322 = sbr.rel (%p1320) target = $region136
        $region135: #{tpu_custom_call.1} parent=87 // pred_region
          %v1323 = vld [vmem:[#allocation8] sm:$0xff]
          %v1324 = vld [vmem:[#allocation5] sm:$0xf]
          %v1326 = vunpack.c.l.b16 %v1324
          %v1327 = vpack.c.b16 %v1326, %v1326
          %1328 = vrot.lane.b32.xlu0 %v1327, 112
          %v1329 = vpop.permute.xlu0 %1328
          %v1331 = vsel %vm953, %v1318, 0
          %vm1333 = vcmask 1043456
          %v1335 = vsel %vm1333, %v1329, 0
          %1337 = vmatprep.subr.bf16.mxu0 0
          %1338 = vmatpush1.bf16.msra.mxu0 %v1335
          %1339 = vmatprep.subr.bf16.mxu0 0
          %1340 = vmatpush1.bf16.msra.mxu0 0
          %1341 = vmatprep.subr.bf16.mxu0 0
          %1342 = vmatpush1.bf16.msra.mxu0 0
          %1343 = vmatprep.subr.bf16.mxu0 0
          %1344 = vmatpush1.bf16.msra.mxu0 0
          %1345 = vmatprep.subr.bf16.mxu0 0
          %1346 = vmatpush1.bf16.msra.mxu0 0
          %1347 = vmatprep.subr.bf16.mxu0 0
          %1348 = vmatpush1.bf16.msra.mxu0 0
          %1349 = vmatprep.subr.bf16.mxu0 0
          %1350 = vmatpush1.bf16.msra.mxu0 0
          %1351 = vmatprep.subr.bf16.mxu0 0
          %1352 = vmatpush1.bf16.msra.mxu0 0
          %1353 = vmatprep.subr.bf16.mxu0 0
          %1354 = vmatpush1.bf16.msra.mxu0 0
          %1355 = vmatprep.subr.bf16.mxu0 0
          %1356 = vmatpush1.bf16.msra.mxu0 0
          %1357 = vmatprep.subr.bf16.mxu0 0
          %1358 = vmatpush1.bf16.msra.mxu0 0
          %1359 = vmatprep.subr.bf16.mxu0 0
          %1360 = vmatpush1.bf16.msra.mxu0 0
          %1361 = vmatprep.subr.bf16.mxu0 0
          %1362 = vmatpush1.bf16.msra.mxu0 0
          %1363 = vmatprep.subr.bf16.mxu0 0
          %1364 = vmatpush1.bf16.msra.mxu0 0
          %1365 = vmatprep.subr.bf16.mxu0 0
          %1366 = vmatpush1.bf16.msra.mxu0 0
          %1367 = vmatprep.subr.bf16.mxu0 0
          %1368 = vmatpush1.bf16.msra.mxu0 0
          %1369 = vmatprep.mubr.bf16.mxu0 0
          %1370 = vmatmul.mubr.bf16.gmra.mrb[0].mxu0 %v1331
          %v1371 = vpop.f32.mrb[0].mxu0
          %v1372 = vadd.f32 0.0, %v1371
          %v1373 = vpop.f32.mrb[0].mxu0
          %v1374 = vpop.f32.mrb[0].mxu0
          %v1375 = vpop.f32.mrb[0].mxu0
          %1376 = vdwg.mxu0
          %v1377 = vadd.f32 %v1323, %v1372
          %1378 = vst.msk [vmem:[#allocation8] sm:$0xff] %vm953, %v1377
        $region136: #{tpu_custom_call.1} parent=87 // pred_fallthru
          _
        %v1379 = vld [vmem:[#allocation8] sm:$0xff]
        %v1380 = vpack.c.bf16 %v1379, %v1379
        %v1382 = vunpack.c.l.b16 %v1380
        %v1383 = vpack.c.b16 %v1382, %v1382
        %1384 = vrot.lane.b32.xlu0 %v1383, 16
        %v1385 = vpop.permute.xlu0 %1384
        %vm1387 = vcmask 191616
        %1388 = vst.msk [vmem:[#allocation7] sm:$0xf] %vm1387, %v1385
        // Predicated region
        $region137: #{tpu_custom_call.1} parent=87 // pred_check
          %p1389 = pneg %p955
        $region138: #{tpu_custom_call.1} parent=87 // pred_check_branch
          %1391 = sbr.rel (%p1389) target = $region140
        $region139: #{tpu_custom_call.1} parent=87 // pred_region
          %v1392 = vld [vmem:[#allocation4 + $0x8] sm:$0xf0]
          %v1394 = vunpack.c.l.b16 %v952
          %v1395 = vpack.c.b16 %v1394, %v1394
          %1396 = vrot.lane.b32.xlu0 %v1395, 104
          %v1397 = vpop.permute.xlu0 %1396
          %v1399 = vrot.slane %v1392, 4
          %v1401 = vsel %vm953, %v1397, 0
          %vm1403 = vcmask 1043456
          %v1405 = vsel %vm1403, %v1399, 0
          %1407 = vmatprep.subr.bf16.mxu0 0
          %1408 = vmatpush1.bf16.msra.mxu0 %v1405
          %1409 = vmatprep.subr.bf16.mxu0 0
          %1410 = vmatpush1.bf16.msra.mxu0 0
          %1411 = vmatprep.subr.bf16.mxu0 0
          %1412 = vmatpush1.bf16.msra.mxu0 0
          %1413 = vmatprep.subr.bf16.mxu0 0
          %1414 = vmatpush1.bf16.msra.mxu0 0
          %1415 = vmatprep.subr.bf16.mxu0 0
          %1416 = vmatpush1.bf16.msra.mxu0 0
          %1417 = vmatprep.subr.bf16.mxu0 0
          %1418 = vmatpush1.bf16.msra.mxu0 0
          %1419 = vmatprep.subr.bf16.mxu0 0
          %1420 = vmatpush1.bf16.msra.mxu0 0
          %1421 = vmatprep.subr.bf16.mxu0 0
          %1422 = vmatpush1.bf16.msra.mxu0 0
          %1423 = vmatprep.subr.bf16.mxu0 0
          %1424 = vmatpush1.bf16.msra.mxu0 0
          %1425 = vmatprep.subr.bf16.mxu0 0
          %1426 = vmatpush1.bf16.msra.mxu0 0
          %1427 = vmatprep.subr.bf16.mxu0 0
          %1428 = vmatpush1.bf16.msra.mxu0 0
          %1429 = vmatprep.subr.bf16.mxu0 0
          %1430 = vmatpush1.bf16.msra.mxu0 0
          %1431 = vmatprep.subr.bf16.mxu0 0
          %1432 = vmatpush1.bf16.msra.mxu0 0
          %1433 = vmatprep.subr.bf16.mxu0 0
          %1434 = vmatpush1.bf16.msra.mxu0 0
          %1435 = vmatprep.subr.bf16.mxu0 0
          %1436 = vmatpush1.bf16.msra.mxu0 0
          %1437 = vmatprep.subr.bf16.mxu0 0
          %1438 = vmatpush1.bf16.msra.mxu0 0
          %1439 = vmatprep.mubr.bf16.mxu0 0
          %1440 = vmatmul.mubr.bf16.gmra.mrb[0].mxu0 %v1401
          %v1441 = vpop.f32.mrb[0].mxu0
          %v1442 = vadd.f32 0.0, %v1441
          %v1443 = vpop.f32.mrb[0].mxu0
          %v1444 = vpop.f32.mrb[0].mxu0
          %v1445 = vpop.f32.mrb[0].mxu0
          %1446 = vdwg.mxu0
          %v1447 = vlaneseq
          %v1448 = vshrl.u32 %v1447, 7
          %v1449 = vstv %s945
          %v1450 = vadd.s32 %v1449, %v1448
          %v1451 = vlaneseq
          %v1452 = vand.u32 %v1451, 127
          %vm1453 = vcmp.le.s32.totalorder %v1452, %v1450
          %v1454 = vsel %vm1453, %v1442, -1e+30
          %1455 = vst.msk [vmem:[#allocation6] sm:$0xff] %vm953, %v1454
        $region140: #{tpu_custom_call.1} parent=87 // pred_fallthru
          _
        %v1456 = vld [vmem:[#allocation6] sm:$0xff]
        %v1457 = vsel %vm953, %v1456, -inf
        %1458 = vmax.xlane.f32.xlu0 %v1457
        %v1459 = vpop.xlane.xlu0 %1458
        %v1460 = vsub.f32 %v1456, %v1459
        %v1461 = vmul.f32 %v1460, 1.442695
        %v1462 = vpow.pop %v1461
        %v1463 = vsel %vm953, %v1462, 0.0
        %1464 = vadd.xlane.f32.xlu0 %v1463
        %v1465 = vpop.xlane.xlu0 %1464
        %v1466 = vrcp.pop %v1465
        %v1467 = vmul.f32 %v1462, %v1466
        %v1468 = vadd.f32 %v1317, %v1467
        %v1469 = vpack.c.bf16 %v1467, %v1467
        %1470 = vst.msk [vmem:[#allocation8] sm:$0xff] %vm953, 0.0
        // Predicated region
        $region141: #{tpu_custom_call.1} parent=87 // pred_check
          %p1471 = pneg %p955
        $region142: #{tpu_custom_call.1} parent=87 // pred_check_branch
          %1473 = sbr.rel (%p1471) target = $region144
        $region143: #{tpu_custom_call.1} parent=87 // pred_region
          %v1474 = vld [vmem:[#allocation8] sm:$0xff]
          %v1475 = vld [vmem:[#allocation5] sm:$0xf]
          %v1477 = vunpack.c.l.b16 %v1475
          %v1478 = vpack.c.b16 %v1477, %v1477
          %1479 = vrot.lane.b32.xlu0 %v1478, 104
          %v1480 = vpop.permute.xlu0 %1479
          %v1482 = vsel %vm953, %v1469, 0
          %vm1484 = vcmask 1043456
          %v1486 = vsel %vm1484, %v1480, 0
          %1488 = vmatprep.subr.bf16.mxu0 0
          %1489 = vmatpush1.bf16.msra.mxu0 %v1486
          %1490 = vmatprep.subr.bf16.mxu0 0
          %1491 = vmatpush1.bf16.msra.mxu0 0
          %1492 = vmatprep.subr.bf16.mxu0 0
          %1493 = vmatpush1.bf16.msra.mxu0 0
          %1494 = vmatprep.subr.bf16.mxu0 0
          %1495 = vmatpush1.bf16.msra.mxu0 0
          %1496 = vmatprep.subr.bf16.mxu0 0
          %1497 = vmatpush1.bf16.msra.mxu0 0
          %1498 = vmatprep.subr.bf16.mxu0 0
          %1499 = vmatpush1.bf16.msra.mxu0 0
          %1500 = vmatprep.subr.bf16.mxu0 0
          %1501 = vmatpush1.bf16.msra.mxu0 0
          %1502 = vmatprep.subr.bf16.mxu0 0
          %1503 = vmatpush1.bf16.msra.mxu0 0
          %1504 = vmatprep.subr.bf16.mxu0 0
          %1505 = vmatpush1.bf16.msra.mxu0 0
          %1506 = vmatprep.subr.bf16.mxu0 0
          %1507 = vmatpush1.bf16.msra.mxu0 0
          %1508 = vmatprep.subr.bf16.mxu0 0
          %1509 = vmatpush1.bf16.msra.mxu0 0
          %1510 = vmatprep.subr.bf16.mxu0 0
          %1511 = vmatpush1.bf16.msra.mxu0 0
          %1512 = vmatprep.subr.bf16.mxu0 0
          %1513 = vmatpush1.bf16.msra.mxu0 0
          %1514 = vmatprep.subr.bf16.mxu0 0
          %1515 = vmatpush1.bf16.msra.mxu0 0
          %1516 = vmatprep.subr.bf16.mxu0 0
          %1517 = vmatpush1.bf16.msra.mxu0 0
          %1518 = vmatprep.subr.bf16.mxu0 0
          %1519 = vmatpush1.bf16.msra.mxu0 0
          %1520 = vmatprep.mubr.bf16.mxu0 0
          %1521 = vmatmul.mubr.bf16.gmra.mrb[0].mxu0 %v1482
          %v1522 = vpop.f32.mrb[0].mxu0
          %v1523 = vadd.f32 0.0, %v1522
          %v1524 = vpop.f32.mrb[0].mxu0
          %v1525 = vpop.f32.mrb[0].mxu0
          %v1526 = vpop.f32.mrb[0].mxu0
          %1527 = vdwg.mxu0
          %v1528 = vadd.f32 %v1474, %v1523
          %1529 = vst.msk [vmem:[#allocation8] sm:$0xff] %vm953, %v1528
        $region144: #{tpu_custom_call.1} parent=87 // pred_fallthru
          _
        %v1530 = vld [vmem:[#allocation8] sm:$0xff]
        %v1531 = vpack.c.bf16 %v1530, %v1530
        %v1533 = vunpack.c.l.b16 %v1531
        %v1534 = vpack.c.b16 %v1533, %v1533
        %1535 = vrot.lane.b32.xlu0 %v1534, 24
        %v1536 = vpop.permute.xlu0 %1535
        %vm1538 = vcmask 257216
        %1539 = vst.msk [vmem:[#allocation7] sm:$0xf] %vm1538, %v1536
        %v1540 = vld [vmem:[#allocation7] sm:$0xf]
        %v1541 = vld [vmem:[#allocation14] sm:$0xf]
        %v1542 = vld [vmem:[#allocation14 + $0x4] sm:$0xf]
        %v1543 = vld [vmem:[#allocation14 + $0x8] sm:$0xf]
        %v1544 = vld [vmem:[#allocation14 + $0xc] sm:$0xf]
        %v1545 = vld [vmem:[#allocation15] sm:$0x1]
        %v1547 = vlaneseq
        %v1548 = vshrl.u32 %v1547, 7
        %v1549 = vsub.s32 0, %v1548
        %v1550 = vrot.slane %v1545, %v1549
        %v1556 = vunpack.c.l.b16 %v1541
        %v1557 = vunpack.c.l.b16 %v1542
        %v1558 = vunpack.c.l.b16 %v1543
        %v1559 = vunpack.c.l.b16 %v1544
        %v1560 = vpack.c.b16 %v1557, %v1556
        %v1561 = vpack.c.b16 %v1559, %v1558
        %vm1564 = vcmask 261120
        %v1566 = vsel %vm1564, %v1540, 0
        %1568 = vmatprep.subr.bf16.mxu0 0
        %1569 = vmatpush1.bf16.msra.mxu0 %v1560
        %1570 = vmatprep.subr.bf16.mxu0 0
        %1571 = vmatpush1.bf16.msra.mxu0 %v1561
        %1572 = vmatprep.subr.bf16.mxu0 0
        %1573 = vmatpush1.bf16.msra.mxu0 0
        %1574 = vmatprep.subr.bf16.mxu0 0
        %1575 = vmatpush1.bf16.msra.mxu0 0
        %1576 = vmatprep.subr.bf16.mxu0 0
        %1577 = vmatpush1.bf16.msra.mxu0 0
        %1578 = vmatprep.subr.bf16.mxu0 0
        %1579 = vmatpush1.bf16.msra.mxu0 0
        %1580 = vmatprep.subr.bf16.mxu0 0
        %1581 = vmatpush1.bf16.msra.mxu0 0
        %1582 = vmatprep.subr.bf16.mxu0 0
        %1583 = vmatpush1.bf16.msra.mxu0 0
        %1584 = vmatprep.subr.bf16.mxu0 0
        %1585 = vmatpush1.bf16.msra.mxu0 0
        %1586 = vmatprep.subr.bf16.mxu0 0
        %1587 = vmatpush1.bf16.msra.mxu0 0
        %1588 = vmatprep.subr.bf16.mxu0 0
        %1589 = vmatpush1.bf16.msra.mxu0 0
        %1590 = vmatprep.subr.bf16.mxu0 0
        %1591 = vmatpush1.bf16.msra.mxu0 0
        %1592 = vmatprep.subr.bf16.mxu0 0
        %1593 = vmatpush1.bf16.msra.mxu0 0
        %1594 = vmatprep.subr.bf16.mxu0 0
        %1595 = vmatpush1.bf16.msra.mxu0 0
        %1596 = vmatprep.subr.bf16.mxu0 0
        %1597 = vmatpush1.bf16.msra.mxu0 0
        %1598 = vmatprep.subr.bf16.mxu0 0
        %1599 = vmatpush1.bf16.msra.mxu0 0
        %1600 = vmatprep.mubr.bf16.mxu0 0
        %1601 = vmatmul.mubr.bf16.gmra.mrb[0].mxu0 %v1566
        %v1602 = vpop.f32.mrb[0].mxu0
        %v1603 = vadd.f32 %v1550, %v1602
        %v1604 = vpop.f32.mrb[0].mxu0
        %v1605 = vpop.f32.mrb[0].mxu0
        %v1606 = vpop.f32.mrb[0].mxu0
        %1607 = vdwg.mxu0
        %v1608 = vadd.f32 %v947, %v1603
        %v1609 = vld [vmem:[%s11] sm:$0x1]
        %v1610 = vld [vmem:[%s12] sm:$0x1]
        %v1611 = vsel %vm1564, %v1608, 0.0
        %1612 = vadd.xlane.f32.xlu0 %v1611
        %v1613 = vpop.xlane.xlu0 %1612
        %v1614 = vrcp.pop 32.0
        %v1615 = vmul.f32 %v1613, %v1614
        %v1616 = vsub.f32 %v1608, %v1615
        %v1617 = vmul.f32 %v1616, %v1616
        %v1618 = vsel %vm1564, %v1617, 0.0
        %1619 = vadd.xlane.f32.xlu0 %v1618
        %v1620 = vpop.xlane.xlu0 %1619
        %v1621 = vmul.f32 %v1620, %v1614
        %v1622 = vadd.f32 %v1621, 1e-05
        %v1623 = vrsqrt.pop %v1622
        %v1624 = vmul.f32 %v1616, %v1623
        %v1626 = vlaneseq
        %v1627 = vshrl.u32 %v1626, 7
        %v1628 = vsub.s32 0, %v1627
        %v1629 = vrot.slane %v1609, %v1628
        %v1631 = vmul.f32 %v1624, %v1629
        %v1633 = vlaneseq
        %v1634 = vshrl.u32 %v1633, 7
        %v1635 = vsub.s32 0, %v1634
        %v1636 = vrot.slane %v1610, %v1635
        %v1638 = vadd.f32 %v1631, %v1636
        %v1639 = vpack.c.bf16 %v1638, %v1638
        %v1640 = vld [vmem:[%s13] sm:$0xf]
        %v1641 = vld [vmem:[%s13 + $0x4] sm:$0xf]
        %v1642 = vld [vmem:[%s13 + $0x8] sm:$0xf]
        %v1643 = vld [vmem:[%s13 + $0xc] sm:$0xf]
        %v1644 = vld [vmem:[%s14] sm:$0x1]
        %v1646 = vlaneseq
        %v1647 = vshrl.u32 %v1646, 7
        %v1648 = vsub.s32 0, %v1647
        %v1649 = vrot.slane %v1644, %v1648
        %v1655 = vunpack.c.l.b16 %v1640
        %v1656 = vunpack.c.l.b16 %v1641
        %v1657 = vunpack.c.l.b16 %v1642
        %v1658 = vunpack.c.l.b16 %v1643
        %v1659 = vpack.c.b16 %v1656, %v1655
        %v1660 = vpack.c.b16 %v1658, %v1657
        %v1664 = vsel %vm1564, %v1639, 0
        %1666 = vmatprep.subr.bf16.mxu0 0
        %1667 = vmatpush1.bf16.msra.mxu0 %v1659
        %1668 = vmatprep.subr.bf16.mxu0 0
        %1669 = vmatpush1.bf16.msra.mxu0 %v1660
        %1670 = vmatprep.subr.bf16.mxu0 0
        %1671 = vmatpush1.bf16.msra.mxu0 0
        %1672 = vmatprep.subr.bf16.mxu0 0
        %1673 = vmatpush1.bf16.msra.mxu0 0
        %1674 = vmatprep.subr.bf16.mxu0 0
        %1675 = vmatpush1.bf16.msra.mxu0 0
        %1676 = vmatprep.subr.bf16.mxu0 0
        %1677 = vmatpush1.bf16.msra.mxu0 0
        %1678 = vmatprep.subr.bf16.mxu0 0
        %1679 = vmatpush1.bf16.msra.mxu0 0
        %1680 = vmatprep.subr.bf16.mxu0 0
        %1681 = vmatpush1.bf16.msra.mxu0 0
        %1682 = vmatprep.subr.bf16.mxu0 0
        %1683 = vmatpush1.bf16.msra.mxu0 0
        %1684 = vmatprep.subr.bf16.mxu0 0
        %1685 = vmatpush1.bf16.msra.mxu0 0
        %1686 = vmatprep.subr.bf16.mxu0 0
        %1687 = vmatpush1.bf16.msra.mxu0 0
        %1688 = vmatprep.subr.bf16.mxu0 0
        %1689 = vmatpush1.bf16.msra.mxu0 0
        %1690 = vmatprep.subr.bf16.mxu0 0
        %1691 = vmatpush1.bf16.msra.mxu0 0
        %1692 = vmatprep.subr.bf16.mxu0 0
        %1693 = vmatpush1.bf16.msra.mxu0 0
        %1694 = vmatprep.subr.bf16.mxu0 0
        %1695 = vmatpush1.bf16.msra.mxu0 0
        %1696 = vmatprep.subr.bf16.mxu0 0
        %1697 = vmatpush1.bf16.msra.mxu0 0
        %1698 = vmatprep.mubr.bf16.mxu0 0
        %1699 = vmatmul.mubr.bf16.gmra.mrb[0].mxu0 %v1664
        %v1700 = vpop.f32.mrb[0].mxu0
        %v1701 = vadd.f32 %v1649, %v1700
        %v1702 = vpop.f32.mrb[0].mxu0
        %v1703 = vpop.f32.mrb[0].mxu0
        %v1704 = vpop.f32.mrb[0].mxu0
        %1705 = vdwg.mxu0
        %v1706 = vmul.f32 %v1701, 0.5
        %v1707 = vmul.f32 %v1701, 0.70710677
        %vm1708 = vcmp.ge.f32.partialorder %v1707, 0.0
        %v1709 = vsel %vm1708, 1.0, -1.0
        %v1710 = vand.u32 2147483647, %v1707
        %v1711 = vmul.f32 %v1710, 0.3275911
        %v1712 = vadd.f32 %v1711, 1.0
        %v1713 = vrcp.pop %v1712
        %v1714 = vmul.f32 1.0, %v1713
        %v1715 = vmul.f32 %v1714, 1.0614054
        %v1716 = vadd.f32 %v1715, -1.4531521
        %v1717 = vmul.f32 %v1716, %v1714
        %v1718 = vadd.f32 %v1717, 1.4214138
        %v1719 = vmul.f32 %v1718, %v1714
        %v1720 = vadd.f32 %v1719, -0.28449672
        %v1721 = vmul.f32 %v1720, %v1714
        %v1722 = vadd.f32 %v1721, 0.2548296
        %v1723 = vmul.f32 %v1722, %v1714
        %v1724 = vsub.f32 0.0, %v1710
        %v1725 = vmul.f32 %v1724, %v1710
        %v1726 = vmul.f32 %v1725, 1.442695
        %v1727 = vpow.pop %v1726
        %v1728 = vmul.f32 %v1723, %v1727
        %v1729 = vsub.f32 1.0, %v1728
        %v1730 = vmul.f32 %v1709, %v1729
        %v1731 = vadd.f32 %v1730, 1.0
        %v1732 = vmul.f32 %v1706, %v1731
        %v1733 = vpack.c.bf16 %v1732, %v1732
        %v1734 = vld [vmem:[%s15] sm:$0xf]
        %v1735 = vld [vmem:[%s15 + $0x4] sm:$0xf]
        %v1736 = vld [vmem:[%s15 + $0x8] sm:$0xf]
        %v1737 = vld [vmem:[%s15 + $0xc] sm:$0xf]
        %v1738 = vld [vmem:[%s15 + $0x10] sm:$0xf]
        %v1739 = vld [vmem:[%s15 + $0x14] sm:$0xf]
        %v1740 = vld [vmem:[%s15 + $0x18] sm:$0xf]
        %v1741 = vld [vmem:[%s15 + $0x1c] sm:$0xf]
        %v1742 = vld [vmem:[%s16] sm:$0x1]
        %v1744 = vlaneseq
        %v1745 = vshrl.u32 %v1744, 7
        %v1746 = vsub.s32 0, %v1745
        %v1747 = vrot.slane %v1742, %v1746
        %v1757 = vunpack.c.l.b16 %v1734
        %v1758 = vunpack.c.l.b16 %v1735
        %v1759 = vunpack.c.l.b16 %v1736
        %v1760 = vunpack.c.l.b16 %v1737
        %v1761 = vunpack.c.l.b16 %v1738
        %v1762 = vunpack.c.l.b16 %v1739
        %v1763 = vunpack.c.l.b16 %v1740
        %v1764 = vunpack.c.l.b16 %v1741
        %v1765 = vpack.c.b16 %v1758, %v1757
        %v1766 = vpack.c.b16 %v1760, %v1759
        %v1767 = vpack.c.b16 %v1762, %v1761
        %v1768 = vpack.c.b16 %v1764, %v1763
        %vm1773 = vcmask 523264
        %v1775 = vsel %vm1773, %v1733, 0
        %1777 = vmatprep.subr.bf16.mxu0 0
        %1778 = vmatpush1.bf16.msra.mxu0 %v1765
        %1779 = vmatprep.subr.bf16.mxu0 0
        %1780 = vmatpush1.bf16.msra.mxu0 %v1766
        %1781 = vmatprep.subr.bf16.mxu0 0
        %1782 = vmatpush1.bf16.msra.mxu0 %v1767
        %1783 = vmatprep.subr.bf16.mxu0 0
        %1784 = vmatpush1.bf16.msra.mxu0 %v1768
        %1785 = vmatprep.subr.bf16.mxu0 0
        %1786 = vmatpush1.bf16.msra.mxu0 0
        %1787 = vmatprep.subr.bf16.mxu0 0
        %1788 = vmatpush1.bf16.msra.mxu0 0
        %1789 = vmatprep.subr.bf16.mxu0 0
        %1790 = vmatpush1.bf16.msra.mxu0 0
        %1791 = vmatprep.subr.bf16.mxu0 0
        %1792 = vmatpush1.bf16.msra.mxu0 0
        %1793 = vmatprep.subr.bf16.mxu0 0
        %1794 = vmatpush1.bf16.msra.mxu0 0
        %1795 = vmatprep.subr.bf16.mxu0 0
        %1796 = vmatpush1.bf16.msra.mxu0 0
        %1797 = vmatprep.subr.bf16.mxu0 0
        %1798 = vmatpush1.bf16.msra.mxu0 0
        %1799 = vmatprep.subr.bf16.mxu0 0
        %1800 = vmatpush1.bf16.msra.mxu0 0
        %1801 = vmatprep.subr.bf16.mxu0 0
        %1802 = vmatpush1.bf16.msra.mxu0 0
        %1803 = vmatprep.subr.bf16.mxu0 0
        %1804 = vmatpush1.bf16.msra.mxu0 0
        %1805 = vmatprep.subr.bf16.mxu0 0
        %1806 = vmatpush1.bf16.msra.mxu0 0
        %1807 = vmatprep.subr.bf16.mxu0 0
        %1808 = vmatpush1.bf16.msra.mxu0 0
        %1809 = vmatprep.mubr.bf16.mxu0 0
        %1810 = vmatmul.mubr.bf16.gmra.mrb[0].mxu0 %v1775
        %v1811 = vpop.f32.mrb[0].mxu0
        %v1812 = vadd.f32 %v1747, %v1811
        %v1813 = vpop.f32.mrb[0].mxu0
        %v1814 = vpop.f32.mrb[0].mxu0
        %v1815 = vpop.f32.mrb[0].mxu0
        %1816 = vdwg.mxu0
        %v1817 = vadd.f32 %v1608, %v1812
        %1818 = vst.msk [vmem:[%s662] sm:$0xff] %vm1564, %v1817
        %v1819 = vmul.f32 %v1468, 0.25
        %1820 = vst.msk [vmem:[%s669] sm:$0xff] %vm953, %v1819
        %s1821 = sand.u32 %s425, 1
        %s1822 = scalar_lea.sflag [#allocation11], %s1821
        %s1823 = sand.u32 %s425, 1
        %s1824 = smul.addr %s1823, 8
        %s1825 = scalar_lea.vmem [#allocation18], %s1824
        %s1826 = sand.u32 %s453, 1
        %s1827 = scalar_lea.sflag [#allocation20], %s1826
        %s1828 = sand.u32 %s453, 1
        %s1829 = smul.addr %s1828, 8
        %s1830 = scalar_lea.vmem [#allocation19], %s1829
        // Predicated region
        $region145: #{tpu_custom_call.1} parent=87 // pred_check
          %p1831 = pneg %p435
        $region146: #{tpu_custom_call.1} parent=87 // pred_check_branch
          %1833 = sbr.rel (%p1831) target = $region148
        $region147: #{tpu_custom_call.1} parent=87 // pred_region
          %s1835 = ssub.s32 128, 128
          %1836 = vsyncadd %s1822, %s1835
          %s1837 = sadd.s32 %s46, %s45
          %s1838 = smul.addr %s1837, 128
          %s1839 = scalar_lea.hbm %s17, %s1838
          %s1841 = sshll.u32 %s1825, 4
          %s1842 = int_to_ptr.vmem [resolvable:$true] %s1841
          %1844 = dma.vmem_to_hbm [thread:$0]  %s1842, 128, %s1839, %s1822
        $region148: #{tpu_custom_call.1} parent=87 // pred_fallthru
          _
        // Predicated region
        $region149: #{tpu_custom_call.1} parent=87 // pred_check
          %p1845 = pneg %p463
        $region150: #{tpu_custom_call.1} parent=87 // pred_check_branch
          %1847 = sbr.rel (%p1845) target = $region152
        $region151: #{tpu_custom_call.1} parent=87 // pred_region
          %s1849 = ssub.s32 128, 128
          %1850 = vsyncadd %s1827, %s1849
          %s1851 = sadd.s32 %s46, %s45
          %s1852 = smul.addr %s1851, 128
          %s1853 = scalar_lea.hbm %s18, %s1852
          %s1855 = sshll.u32 %s1830, 4
          %s1856 = int_to_ptr.vmem [resolvable:$true] %s1855
          %1858 = dma.vmem_to_hbm [thread:$0]  %s1856, 128, %s1853, %s1827
        $region152: #{tpu_custom_call.1} parent=87 // pred_fallthru
          _
      $region88: #{tpu_custom_call.1} parent=5 // pred_fallthru
        _
      %p1859 = scmp.le.s32.totalorder 2, %s36
      // Predicated region
      $region153: #{tpu_custom_call.1} parent=5 // pred_check
        %p1860 = pneg %p1859
      $region154: #{tpu_custom_call.1} parent=5 // pred_check_branch
        %1862 = sbr.rel (%p1860) target = $region156
      $region155: #{tpu_custom_call.1} parent=5 // pred_region
        %s1863 = ssub.s32 %s36, 2
        // Predicated region
        $region157: #{tpu_custom_call.1} parent=155 // pred_check
          %p1864 = pneg %p441
        $region158: #{tpu_custom_call.1} parent=155 // pred_check_branch
          %1866 = sbr.rel (%p1864) target = $region160
        $region159: #{tpu_custom_call.1} parent=155 // pred_region
          %s1867 = sand.u32 %s426, 1
          %s1868 = scalar_lea.sflag [#allocation11], %s1867
          %s1869 = sand.u32 %s426, 1
          %s1870 = smul.addr %s1869, 8
          %s1871 = scalar_lea.vmem [#allocation18], %s1870
          %1872 = dma.done %s1868, 128
        $region160: #{tpu_custom_call.1} parent=155 // pred_fallthru
          _
        // Predicated region
        $region161: #{tpu_custom_call.1} parent=155 // pred_check
          %p1873 = pneg %p469
        $region162: #{tpu_custom_call.1} parent=155 // pred_check_branch
          %1875 = sbr.rel (%p1873) target = $region164
        $region163: #{tpu_custom_call.1} parent=155 // pred_region
          %s1876 = sand.u32 %s454, 1
          %s1877 = scalar_lea.sflag [#allocation20], %s1876
          %s1878 = sand.u32 %s454, 1
          %s1879 = smul.addr %s1878, 8
          %s1880 = scalar_lea.vmem [#allocation19], %s1879
          %1881 = dma.done %s1877, 128
        $region164: #{tpu_custom_call.1} parent=155 // pred_fallthru
          _
      $region156: #{tpu_custom_call.1} parent=5 // pred_fallthru
        _
    $region6: #{tpu_custom_call.1} parent=1 // loop_footer
      %s40 = sadd.s32 1, %s36
    $region7: #{tpu_custom_call.1} parent=1 // loop_footer_branch
      %35 = sbr.rel target = $region3
    $region8: #{tpu_custom_call.1} parent=1 // loop_exit
      _
    %1882 = vsyncpa [#allocation10], 1
    %s1883 = scalar_lea.sflag [#allocation10], 1
    %1884 = vsyncpa %s1883, 1
    %1885 = vsyncpa [#allocation13], 1
    %1886 = vsyncpa [#allocation16], 1
    %1887 = vsyncpa [#allocation11], 1
    %s1888 = scalar_lea.sflag [#allocation11], 1
    %1889 = vsyncpa %s1888, 1
    %1890 = vsyncpa [#allocation20], 1
    %s1891 = scalar_lea.sflag [#allocation20], 1
    %1892 = vsyncpa %s1891, 1

</llo_original>
